<compile_context>
chip_gen: v7x
topology: tpu7x:2x2x1
jax: 0.10.0
libtpu: 0.0.40
codegen_flags: <defaults>
</compile_context>

<pallas_src>
import functools
from types import SimpleNamespace

import jax
import jax.numpy as jnp
from jax.experimental import pallas as pl
from jax.experimental.pallas import tpu as pltpu

# eval-mode BatchNorm1d with default running stats (mean=0, var=1, affine identity).
# TODO(synk): a real checkpoint needs the full (gamma, beta, mu, sigma^2) fold here.
_BN_SCALE = 1.0 / (1.0 + 1e-5) ** 0.5


def _relu(x):
    return jnp.maximum(x, 0.0)


# ---------------------------------------------------------------------------
# Single fused Pallas kernel: backbones + reshape layers + FusionNetwork + classifier
# ---------------------------------------------------------------------------
def _fused_net_kernel(*refs, steps, node_steps, multiplier, num_input_nodes,
                      C, L, max_prev, chosen_idx1, chosen_idx2):
    it = iter(refs)
    mixw = next(it)            # SMEM (steps*max_prev,) softmaxed mixture weights (f32)
    img = next(it)             # VMEM (1, H*W, Cin1_pad) one sample, channel-last rows
    txt = next(it)             # VMEM (1, T, Cin2)
    n1w1, n1b1, n1w2, n1b2 = (next(it) for _ in range(4))   # image backbone (bf16 W, f32 b)
    n2w1, n2b1, n2w2, n2b2 = (next(it) for _ in range(4))   # text backbone
    pool_img = next(it)        # (L, H*W)  adaptive-avg-pool matrix (bf16)
    pool_txt = next(it)        # (L, T)
    rsh_w = next(it)           # (sum(C_ins), num_input_nodes*C) block-diag, BN folded (bf16)
    rsh_b = next(it)           # (1, num_input_nodes*C) f32
    node_params = [[(next(it), next(it)) for _ in range(node_steps)]
                   for _ in range(steps)]
    clf_w = next(it)           # (L*multiplier*C, o_pad) rows permuted to kernel order (bf16)
    clf_b = next(it)           # (1, o_pad) f32
    out_ref = next(it)         # (1, 1, o_pad)

    def mm(a, b):
        # bf16 MXU operands (weights pre-cast at pack time), f32 accumulation.
        return jnp.dot(a.astype(jnp.bfloat16), b.astype(jnp.bfloat16),
                       preferred_element_type=jnp.float32)

    # --- backbones --------------------------------------------------------------
    # TODO(synk): network1 / network2 are injected backbones in the reference; they are
    # implemented as 2-stage 1x1-conv(+ReLU) stand-ins returning a list of features.
    x_img = img[0]                                    # (H*W, Cin1_pad)
    x_txt = txt[0]                                    # (T, Cin2)
    r1 = _relu(mm(x_img, n1w1[...]) + n1b1[...])      # (H*W, 8)
    r2 = _relu(mm(r1, n1w2[...]) + n1b2[...])         # (H*W, 16)
    t1 = _relu(mm(x_txt, n2w1[...]) + n2b1[...])      # (T, 12)
    t2 = _relu(mm(t1, n2w2[...]) + n2b2[...])         # (T, 24)
    img_feats, txt_feats = [r1, r2], [t1, t2]

    # --- ReshapeInputLayer_MMIMDB (pool-first, all layers fused into one matmul) -
    # AdaptiveAvgPool1d first: exact reorder because every pool row sums to 1, so it
    # commutes with the 1x1 conv + eval-mode BN folded into rsh_w / rsh_b.
    f_img = jnp.concatenate([img_feats[i] for i in chosen_idx1], axis=1)  # (H*W, 24)
    f_txt = jnp.concatenate([txt_feats[i] for i in chosen_idx2], axis=1)  # (T, 36)
    pooled = jnp.concatenate([mm(pool_img[...], f_img),
                              mm(pool_txt[...], f_txt)], axis=1)          # (L, sum C_ins)
    nodes_in = mm(pooled, rsh_w[...]) + rsh_b[...]                        # (L, n_in*C)
    nodes = [nodes_in[:, i * C:(i + 1) * C] for i in range(num_input_nodes)]

    # --- FusionNetwork ------------------------------------------------------------
    # TODO(synk): BM-NAS FusionNetwork internals (num_keep_edges top-k edge selection,
    # attention cells) are not defined in the reference; DARTS-style stand-in: softmax
    # mixture over all previous nodes + node_steps of (C->C linear + ReLU).
    for s in range(steps):
        mixed = mixw[s * max_prev] * nodes[0]
        for p in range(1, len(nodes)):
            mixed = mixed + mixw[s * max_prev + p] * nodes[p]
        h = mixed
        for nw, nb in node_params[s]:
            h = _relu(mm(h, nw[...]) + nb[...])
        nodes.append(h)

    # --- central classifier (merged; padded logits are the only HBM store) ---------
    x_cat = jnp.concatenate(nodes[-multiplier:], axis=1)                  # (L, mult*C)
    x_flat = jnp.concatenate([x_cat[l:l + 1, :] for l in range(L)],
                             axis=1)                                      # (1, L*mult*C)
    logits = mm(x_flat, clf_w[...]) + clf_b[...]                          # (1, o_pad)
    out_ref[0] = logits.astype(out_ref.dtype)


# ---------------------------------------------------------------------------
# pallas_call wrapper
# ---------------------------------------------------------------------------
def fused_net_pallas(mixw, img_rows, txt_rows, packed, args, chosen_idx1, chosen_idx2):
    B, hw, cin_img = img_rows.shape
    _, T, cin_txt = txt_rows.shape
    o_pad = packed["clf_w"].shape[1]
    steps, max_prev = packed["alphas"].shape

    inputs = [mixw, img_rows, txt_rows,
              packed["n1w1"], packed["n1b1"], packed["n1w2"], packed["n1b2"],
              packed["n2w1"], packed["n2b1"], packed["n2w2"], packed["n2b2"],
              packed["pool_img"], packed["pool_txt"],
              packed["rsh_w"], packed["rsh_b"]]
    for s in range(args.steps):
        for t in range(args.node_steps):
            inputs += [packed["node_w"][s][t], packed["node_b"][s][t]]
    inputs += [packed["clf_w"], packed["clf_b"]]

    def const_spec(arr):   # weight resident across the whole grid (block index unchanged)
        nd = arr.ndim
        return pl.BlockSpec(arr.shape, lambda b, _nd=nd: (0,) * _nd)

    in_specs = ([pl.BlockSpec(memory_space=pltpu.MemorySpace.SMEM),      # mixw (1-D scalars)
                 pl.BlockSpec((1, hw, cin_img), lambda b: (b, 0, 0)),    # per-sample image rows
                 pl.BlockSpec((1, T, cin_txt), lambda b: (b, 0, 0))]     # per-sample text rows
                + [const_spec(a) for a in inputs[3:]])

    kernel = functools.partial(
        _fused_net_kernel, steps=args.steps, node_steps=args.node_steps,
        multiplier=args.multiplier, num_input_nodes=args.num_input_nodes,
        C=args.C, L=args.L, max_prev=max_prev,
        chosen_idx1=tuple(chosen_idx1), chosen_idx2=tuple(chosen_idx2))

    # Per-sample blocks keep VMEM usage a few KiB regardless of B (fits v5e/v6e/v7x alike).
    # TODO(synk): for a real (large-M) backbone, add a row-tile grid axis sized per chip
    # generation (64 MiB VMEM on v7x vs 128 MiB on v5e/v6e).
    return pl.pallas_call(
        kernel,
        grid=(B,),
        out_shape=jax.ShapeDtypeStruct((B, 1, o_pad), jnp.float32),
        in_specs=in_specs,
        out_specs=pl.BlockSpec((1, 1, o_pad), lambda b: (b, 0, 0)),
        compiler_params=pltpu.CompilerParams(
            dimension_semantics=("parallel",)),   # v7x: shard batch over the 2 TensorCores
    )(*inputs)


# ---------------------------------------------------------------------------
# Forward (jitted): only input-layout plumbing lives outside the kernel
# ---------------------------------------------------------------------------
def searchable_image_text_net_forward(packed, modality1, modality2, *,
                                      args, chosen_idx1, chosen_idx2):
    B, cin1, H, W = modality1.shape
    _, cin2, T = modality2.shape
    # NCHW / NCT -> channel-last rows per sample; pad the tiny image Cin (3) up to the
    # 8-sublane granule baked into the first conv weight.
    # TODO(synk): at real backbone scale avoid materializing this transpose in HBM (change
    # the upstream layout or fold it into the BlockSpec index_map / an in-kernel transpose).
    img_rows = jnp.transpose(modality1, (0, 2, 3, 1)).reshape(B, H * W, cin1)
    k_pad = packed["n1w1"].shape[0]
    if cin1 < k_pad:
        img_rows = jnp.pad(img_rows, ((0, 0), (0, 0), (0, k_pad - cin1)))
    txt_rows = jnp.transpose(modality2, (0, 2, 1))                      # (B, T, cin2)

    # softmaxed arch weights, flattened 1-D for SMEM (-inf padding -> exactly 0 weight).
    mixw = jax.nn.softmax(packed["alphas"], axis=-1).reshape(-1)

    out = fused_net_pallas(mixw, img_rows, txt_rows, packed, args,
                           chosen_idx1, chosen_idx2)                    # (B, 1, o_pad)
    return out[:, 0, :args.num_outputs]


# ---------------------------------------------------------------------------
# Deterministic parameter construction + one-time kernel-ready packing
# ---------------------------------------------------------------------------
def _init(key, shape, scale=0.05):
    return scale * jax.random.normal(key, shape, dtype=jnp.float32)


def adaptive_avg_pool_matrix(l_in, l_out):
    """(l_out, l_in) matrix P with P @ y == AdaptiveAvgPool1d(l_out)(y) over rows."""
    i = jnp.arange(l_out)
    start = (i * l_in) // l_out
    end = ((i + 1) * l_in + l_out - 1) // l_out
    j = jnp.arange(l_in)[None, :]
    mask = (j >= start[:, None]) & (j < end[:, None])
    return mask.astype(jnp.float32) / (end - start)[:, None].astype(jnp.float32)


def build_params(key, args, C_ins):
    """Logical parameters mirroring the PyTorch module structure (synthetic, f32)."""
    C, L, mult = args.C, args.L, args.multiplier
    ks = iter(jax.random.split(key, 32))
    p = {}
    p["net1_w1"] = _init(next(ks), (3, 8));    p["net1_b1"] = jnp.zeros((8,), jnp.float32)
    p["net1_w2"] = _init(next(ks), (8, 16));   p["net1_b2"] = jnp.zeros((16,), jnp.float32)
    p["net2_w1"] = _init(next(ks), (16, 12));  p["net2_b1"] = jnp.zeros((12,), jnp.float32)
    p["net2_w2"] = _init(next(ks), (12, 24));  p["net2_b2"] = jnp.zeros((24,), jnp.float32)
    p["reshape_w"] = [_init(next(ks), (C, cin)) for cin in C_ins]      # torch conv (out,in)
    p["reshape_b"] = [jnp.zeros((C, 1), jnp.float32) for _ in C_ins]
    p["alphas"] = [_init(next(ks), (args.num_input_nodes + i,), scale=1.0)
                   for i in range(args.steps)]
    p["node_w"] = [[_init(next(ks), (C, C)) for _ in range(args.node_steps)]
                   for _ in range(args.steps)]
    p["node_b"] = [[jnp.zeros((C,), jnp.float32) for _ in range(args.node_steps)]
                   for _ in range(args.steps)]
    # classifier weight rows follow torch .view(B,-1) order on (B, mult*C, L): (k*C+c)*L+l.
    p["clf_w"] = _init(next(ks), (C * L * mult, args.num_outputs))
    p["clf_b"] = jnp.zeros((args.num_outputs,), jnp.float32)
    return p


def pack_params(p, args, C_ins, *, img_hw, txt_len):
    """Kernel-ready packing done ONCE: transposes, BN fold, pool matrices, block-diag
    reshape weight, classifier row permutation, lane padding, bf16 casts."""
    C, L, mult = args.C, args.L, args.multiplier
    lin_img = img_hw[0] * img_hw[1]
    packed = {}
    # backbone weights (in, out): pad K of the first image 1x1 conv 3 -> 8 sublanes; bf16.
    w1 = p["net1_w1"]
    k_pad = max(8, w1.shape[0])
    n1w1 = jnp.zeros((k_pad, w1.shape[1]), jnp.float32).at[:w1.shape[0]].set(w1)
    packed["n1w1"] = n1w1.astype(jnp.bfloat16)
    packed["n1b1"] = p["net1_b1"].reshape(1, -1)
    packed["n1w2"] = p["net1_w2"].astype(jnp.bfloat16)
    packed["n1b2"] = p["net1_b2"].reshape(1, -1)
    packed["n2w1"] = p["net2_w1"].astype(jnp.bfloat16)
    packed["n2b1"] = p["net2_b1"].reshape(1, -1)
    packed["n2w2"] = p["net2_w2"].astype(jnp.bfloat16)
    packed["n2b2"] = p["net2_b2"].reshape(1, -1)
    # adaptive-avg-pool matrices, (L, Lin): exact PyTorch semantics, O(L*Lin) memory
    # (no O(B^2) kron), applied per sample on the left.
    packed["pool_img"] = adaptive_avg_pool_matrix(lin_img, L).astype(jnp.bfloat16)
    packed["pool_txt"] = adaptive_avg_pool_matrix(txt_len, L).astype(jnp.bfloat16)
    # block-diagonal reshape weight over the lane-concatenated pooled features
    # (eval-mode BN scale folded; see _BN_SCALE TODO for a real checkpoint).
    offs = [0]
    for cin in C_ins:
        offs.append(offs[-1] + cin)
    rsh_w = jnp.zeros((offs[-1], len(C_ins) * C), jnp.float32)
    rsh_b = jnp.zeros((1, len(C_ins) * C), jnp.float32)
    for i, (w, b) in enumerate(zip(p["reshape_w"], p["reshape_b"])):
        rsh_w = rsh_w.at[offs[i]:offs[i + 1], i * C:(i + 1) * C].set(_BN_SCALE * w.T)
        rsh_b = rsh_b.at[0, i * C:(i + 1) * C].set(_BN_SCALE * b.reshape(-1))
    packed["rsh_w"] = rsh_w.astype(jnp.bfloat16)
    packed["rsh_b"] = rsh_b
    # fusion arch params: pad to a rectangle with -inf (softmax gives exact 0 weight).
    max_prev = args.num_input_nodes + args.steps - 1
    alphas = jnp.full((args.steps, max_prev), -jnp.inf, jnp.float32)
    for s, a in enumerate(p["alphas"]):
        alphas = alphas.at[s, :a.shape[0]].set(a)
    packed["alphas"] = alphas
    # node linears: (in, out) = torch (out, in).T, bf16; biases (1, C) f32.
    packed["node_w"] = [[w.T.astype(jnp.bfloat16) for w in row] for row in p["node_w"]]
    packed["node_b"] = [[b.reshape(1, -1) for b in row] for row in p["node_b"]]
    # classifier: permute rows from torch .view(B,-1) order ((k*C+c)*L + l) to the kernel
    # flatten order (l*mult*C + k*C + c); pad outputs to 128 lanes; bf16 weight, f32 bias.
    o = args.num_outputs
    o_pad = ((o + 127) // 128) * 128
    q = jnp.arange(L * mult * C)
    torch_rows = (q % (mult * C)) * L + (q // (mult * C))
    clf_w_perm = p["clf_w"][torch_rows, :]
    clf_w = jnp.zeros((L * mult * C, o_pad), jnp.float32).at[:, :o].set(clf_w_perm)
    packed["clf_w"] = clf_w.astype(jnp.bfloat16)
    packed["clf_b"] = jnp.zeros((1, o_pad), jnp.float32).at[0, :o].set(p["clf_b"])
    return packed


if __name__ == "__main__":
    args = SimpleNamespace(
        seed=0, C=16, L=8, multiplier=2, steps=2, node_steps=1,
        num_input_nodes=4, num_keep_edges=2, num_outputs=23, parallel=False,
    )
    chosen_channels_idx1 = (0, 1)
    chosen_channels_idx2 = (0, 1)
    C_ins = [8, 16, 12, 24]  # channels of the chosen backbone features
    assert len(C_ins) == args.num_input_nodes

    key = jax.random.PRNGKey(0)
    k_params, k_img, k_txt = jax.random.split(key, 3)
    params = build_params(k_params, args, C_ins)

    modality1 = jax.random.normal(k_img, (2, 3, 8, 8), dtype=jnp.float32)   # NCHW image
    modality2 = jax.random.normal(k_txt, (2, 16, 16), dtype=jnp.float32)    # (B, C, T) text

    B, _, H, W = modality1.shape
    T = modality2.shape[2]
    packed = pack_params(params, args, C_ins, img_hw=(H, W), txt_len=T)

    forward = jax.jit(functools.partial(
        searchable_image_text_net_forward, args=args,
        chosen_idx1=chosen_channels_idx1, chosen_idx2=chosen_channels_idx2))

    logits = forward(packed, modality1, modality2)
    jax.block_until_ready(logits)
    assert logits.shape == (B, args.num_outputs), logits.shape
    assert bool(jnp.all(jnp.isfinite(logits)))
    print("KERNEL_OK")
</pallas_src>

<mosaic_0001>
module attributes {stable_mosaic.version = 11 : i64} {
  func.func @_fused_net_kernel(%arg0: i32, %arg1: memref<10xf32, #tpu.memory_space<smem>>, %arg2: memref<1x64x8xf32, #tpu.memory_space<vmem>>, %arg3: memref<1x16x16xf32, #tpu.memory_space<vmem>>, %arg4: memref<8x8xbf16, #tpu.memory_space<vmem>>, %arg5: memref<1x8xf32, #tpu.memory_space<vmem>>, %arg6: memref<8x16xbf16, #tpu.memory_space<vmem>>, %arg7: memref<1x16xf32, #tpu.memory_space<vmem>>, %arg8: memref<16x12xbf16, #tpu.memory_space<vmem>>, %arg9: memref<1x12xf32, #tpu.memory_space<vmem>>, %arg10: memref<12x24xbf16, #tpu.memory_space<vmem>>, %arg11: memref<1x24xf32, #tpu.memory_space<vmem>>, %arg12: memref<8x64xbf16, #tpu.memory_space<vmem>>, %arg13: memref<8x16xbf16, #tpu.memory_space<vmem>>, %arg14: memref<60x64xbf16, #tpu.memory_space<vmem>>, %arg15: memref<1x64xf32, #tpu.memory_space<vmem>>, %arg16: memref<16x16xbf16, #tpu.memory_space<vmem>>, %arg17: memref<1x16xf32, #tpu.memory_space<vmem>>, %arg18: memref<16x16xbf16, #tpu.memory_space<vmem>>, %arg19: memref<1x16xf32, #tpu.memory_space<vmem>>, %arg20: memref<256x128xbf16, #tpu.memory_space<vmem>>, %arg21: memref<1x128xf32, #tpu.memory_space<vmem>>, %arg22: memref<1x1x128xf32, #tpu.memory_space<vmem>>) attributes {dimension_semantics = [#tpu.dimension_semantics<parallel>], iteration_bounds = array<i64: 2>, scalar_prefetch = 0 : i64, scratch_operands = 0 : i64, tpu.core_type = #tpu.core_type<tc>, window_params = [{transform_indices = @transform_0, window_bounds = array<i64: 10>}, {transform_indices = @transform_1, window_bounds = array<i64: 1, 64, 8>}, {transform_indices = @transform_2, window_bounds = array<i64: 1, 16, 16>}, {pipeline_mode = #tpu.pipeline_mode<synchronous>, transform_indices = @transform_3, window_bounds = array<i64: 8, 8>}, {pipeline_mode = #tpu.pipeline_mode<synchronous>, transform_indices = @transform_4, window_bounds = array<i64: 1, 8>}, {pipeline_mode = #tpu.pipeline_mode<synchronous>, transform_indices = @transform_5, window_bounds = array<i64: 8, 16>}, {pipeline_mode = #tpu.pipeline_mode<synchronous>, transform_indices = @transform_6, window_bounds = array<i64: 1, 16>}, {pipeline_mode = #tpu.pipeline_mode<synchronous>, transform_indices = @transform_7, window_bounds = array<i64: 16, 12>}, {pipeline_mode = #tpu.pipeline_mode<synchronous>, transform_indices = @transform_8, window_bounds = array<i64: 1, 12>}, {pipeline_mode = #tpu.pipeline_mode<synchronous>, transform_indices = @transform_9, window_bounds = array<i64: 12, 24>}, {pipeline_mode = #tpu.pipeline_mode<synchronous>, transform_indices = @transform_10, window_bounds = array<i64: 1, 24>}, {pipeline_mode = #tpu.pipeline_mode<synchronous>, transform_indices = @transform_11, window_bounds = array<i64: 8, 64>}, {pipeline_mode = #tpu.pipeline_mode<synchronous>, transform_indices = @transform_12, window_bounds = array<i64: 8, 16>}, {pipeline_mode = #tpu.pipeline_mode<synchronous>, transform_indices = @transform_13, window_bounds = array<i64: 60, 64>}, {pipeline_mode = #tpu.pipeline_mode<synchronous>, transform_indices = @transform_14, window_bounds = array<i64: 1, 64>}, {pipeline_mode = #tpu.pipeline_mode<synchronous>, transform_indices = @transform_15, window_bounds = array<i64: 16, 16>}, {pipeline_mode = #tpu.pipeline_mode<synchronous>, transform_indices = @transform_16, window_bounds = array<i64: 1, 16>}, {pipeline_mode = #tpu.pipeline_mode<synchronous>, transform_indices = @transform_17, window_bounds = array<i64: 16, 16>}, {pipeline_mode = #tpu.pipeline_mode<synchronous>, transform_indices = @transform_18, window_bounds = array<i64: 1, 16>}, {pipeline_mode = #tpu.pipeline_mode<synchronous>, transform_indices = @transform_19, window_bounds = array<i64: 256, 128>}, {pipeline_mode = #tpu.pipeline_mode<synchronous>, transform_indices = @transform_20, window_bounds = array<i64: 1, 128>}, {transform_indices = @transform_21, window_bounds = array<i64: 1, 1, 128>}]} {
    %c0 = arith.constant 0 : index
    %c0_0 = arith.constant 0 : index
    %c0_1 = arith.constant 0 : index
    %0 = vector.load %arg2[%c0, %c0_0, %c0_1] : memref<1x64x8xf32, #tpu.memory_space<vmem>>, vector<1x64x8xf32>
    %1 = vector.shape_cast %0 : vector<1x64x8xf32> to vector<64x8xf32>
    %c0_2 = arith.constant 0 : index
    %c0_3 = arith.constant 0 : index
    %c0_4 = arith.constant 0 : index
    %2 = vector.load %arg3[%c0_2, %c0_3, %c0_4] : memref<1x16x16xf32, #tpu.memory_space<vmem>>, vector<1x16x16xf32>
    %3 = vector.shape_cast %2 : vector<1x16x16xf32> to vector<16x16xf32>
    %c0_5 = arith.constant 0 : index
    %c0_6 = arith.constant 0 : index
    %4 = vector.load %arg4[%c0_5, %c0_6] : memref<8x8xbf16, #tpu.memory_space<vmem>>, vector<8x8xbf16>
    %5 = arith.truncf %1 : vector<64x8xf32> to vector<64x8xbf16>
    %cst = arith.constant dense<0.000000e+00> : vector<64x8xf32>
    %6 = tpu.matmul %5, %4, %cst {dimension_numbers = #tpu.dot_dimension_numbers<[1], [0], [0], [1], [0, 0, 1, 1], [], []>} : vector<64x8xbf16>, vector<8x8xbf16>, vector<64x8xf32> -> vector<64x8xf32>
    %c0_7 = arith.constant 0 : index
    %c0_8 = arith.constant 0 : index
    %7 = vector.load %arg5[%c0_7, %c0_8] : memref<1x8xf32, #tpu.memory_space<vmem>>, vector<1x8xf32>
    %8 = vector.broadcast %7 : vector<1x8xf32> to vector<64x8xf32>
    %9 = arith.addf %6, %8 : vector<64x8xf32>
    %cst_9 = arith.constant 0.000000e+00 : f32
    %10 = vector.broadcast %cst_9 : f32 to vector<64x8xf32>
    %11 = arith.maximumf %9, %10 : vector<64x8xf32>
    %c0_10 = arith.constant 0 : index
    %c0_11 = arith.constant 0 : index
    %12 = vector.load %arg6[%c0_10, %c0_11] : memref<8x16xbf16, #tpu.memory_space<vmem>>, vector<8x16xbf16>
    %13 = arith.truncf %11 : vector<64x8xf32> to vector<64x8xbf16>
    %cst_12 = arith.constant dense<0.000000e+00> : vector<64x16xf32>
    %14 = tpu.matmul %13, %12, %cst_12 {dimension_numbers = #tpu.dot_dimension_numbers<[1], [0], [0], [1], [0, 0, 1, 1], [], []>} : vector<64x8xbf16>, vector<8x16xbf16>, vector<64x16xf32> -> vector<64x16xf32>
    %c0_13 = arith.constant 0 : index
    %c0_14 = arith.constant 0 : index
    %15 = vector.load %arg7[%c0_13, %c0_14] : memref<1x16xf32, #tpu.memory_space<vmem>>, vector<1x16xf32>
    %16 = vector.broadcast %15 : vector<1x16xf32> to vector<64x16xf32>
    %17 = arith.addf %14, %16 : vector<64x16xf32>
    %cst_15 = arith.constant 0.000000e+00 : f32
    %18 = vector.broadcast %cst_15 : f32 to vector<64x16xf32>
    %19 = arith.maximumf %17, %18 : vector<64x16xf32>
    %c0_16 = arith.constant 0 : index
    %c0_17 = arith.constant 0 : index
    %20 = vector.load %arg8[%c0_16, %c0_17] : memref<16x12xbf16, #tpu.memory_space<vmem>>, vector<16x12xbf16>
    %21 = arith.truncf %3 : vector<16x16xf32> to vector<16x16xbf16>
    %cst_18 = arith.constant dense<0.000000e+00> : vector<16x12xf32>
    %22 = tpu.matmul %21, %20, %cst_18 {dimension_numbers = #tpu.dot_dimension_numbers<[1], [0], [0], [1], [0, 0, 1, 1], [], []>} : vector<16x16xbf16>, vector<16x12xbf16>, vector<16x12xf32> -> vector<16x12xf32>
    %c0_19 = arith.constant 0 : index
    %c0_20 = arith.constant 0 : index
    %23 = vector.load %arg9[%c0_19, %c0_20] : memref<1x12xf32, #tpu.memory_space<vmem>>, vector<1x12xf32>
    %24 = vector.broadcast %23 : vector<1x12xf32> to vector<16x12xf32>
    %25 = arith.addf %22, %24 : vector<16x12xf32>
    %cst_21 = arith.constant 0.000000e+00 : f32
    %26 = vector.broadcast %cst_21 : f32 to vector<16x12xf32>
    %27 = arith.maximumf %25, %26 : vector<16x12xf32>
    %c0_22 = arith.constant 0 : index
    %c0_23 = arith.constant 0 : index
    %28 = vector.load %arg10[%c0_22, %c0_23] : memref<12x24xbf16, #tpu.memory_space<vmem>>, vector<12x24xbf16>
    %29 = arith.truncf %27 : vector<16x12xf32> to vector<16x12xbf16>
    %cst_24 = arith.constant dense<0.000000e+00> : vector<16x24xf32>
    %30 = tpu.matmul %29, %28, %cst_24 {dimension_numbers = #tpu.dot_dimension_numbers<[1], [0], [0], [1], [0, 0, 1, 1], [], []>} : vector<16x12xbf16>, vector<12x24xbf16>, vector<16x24xf32> -> vector<16x24xf32>
    %c0_25 = arith.constant 0 : index
    %c0_26 = arith.constant 0 : index
    %31 = vector.load %arg11[%c0_25, %c0_26] : memref<1x24xf32, #tpu.memory_space<vmem>>, vector<1x24xf32>
    %32 = vector.broadcast %31 : vector<1x24xf32> to vector<16x24xf32>
    %33 = arith.addf %30, %32 : vector<16x24xf32>
    %cst_27 = arith.constant 0.000000e+00 : f32
    %34 = vector.broadcast %cst_27 : f32 to vector<16x24xf32>
    %35 = arith.maximumf %33, %34 : vector<16x24xf32>
    %36 = tpu.concatenate %11, %19 in 1 : vector<64x8xf32>, vector<64x16xf32> -> vector<64x24xf32>
    %37 = tpu.concatenate %27, %35 in 1 : vector<16x12xf32>, vector<16x24xf32> -> vector<16x36xf32>
    %c0_28 = arith.constant 0 : index
    %c0_29 = arith.constant 0 : index
    %38 = vector.load %arg12[%c0_28, %c0_29] : memref<8x64xbf16, #tpu.memory_space<vmem>>, vector<8x64xbf16>
    %39 = arith.truncf %36 : vector<64x24xf32> to vector<64x24xbf16>
    %cst_30 = arith.constant dense<0.000000e+00> : vector<8x24xf32>
    %40 = tpu.matmul %38, %39, %cst_30 {dimension_numbers = #tpu.dot_dimension_numbers<[1], [0], [0], [1], [0, 0, 1, 1], [], []>} : vector<8x64xbf16>, vector<64x24xbf16>, vector<8x24xf32> -> vector<8x24xf32>
    %c0_31 = arith.constant 0 : index
    %c0_32 = arith.constant 0 : index
    %41 = vector.load %arg13[%c0_31, %c0_32] : memref<8x16xbf16, #tpu.memory_space<vmem>>, vector<8x16xbf16>
    %42 = arith.truncf %37 : vector<16x36xf32> to vector<16x36xbf16>
    %cst_33 = arith.constant dense<0.000000e+00> : vector<8x36xf32>
    %43 = tpu.matmul %41, %42, %cst_33 {dimension_numbers = #tpu.dot_dimension_numbers<[1], [0], [0], [1], [0, 0, 1, 1], [], []>} : vector<8x16xbf16>, vector<16x36xbf16>, vector<8x36xf32> -> vector<8x36xf32>
    %44 = tpu.concatenate %40, %43 in 1 : vector<8x24xf32>, vector<8x36xf32> -> vector<8x60xf32>
    %c0_34 = arith.constant 0 : index
    %c0_35 = arith.constant 0 : index
    %45 = vector.load %arg14[%c0_34, %c0_35] : memref<60x64xbf16, #tpu.memory_space<vmem>>, vector<60x64xbf16>
    %46 = arith.truncf %44 : vector<8x60xf32> to vector<8x60xbf16>
    %cst_36 = arith.constant dense<0.000000e+00> : vector<8x64xf32>
    %47 = tpu.matmul %46, %45, %cst_36 {dimension_numbers = #tpu.dot_dimension_numbers<[1], [0], [0], [1], [0, 0, 1, 1], [], []>} : vector<8x60xbf16>, vector<60x64xbf16>, vector<8x64xf32> -> vector<8x64xf32>
    %c0_37 = arith.constant 0 : index
    %c0_38 = arith.constant 0 : index
    %48 = vector.load %arg15[%c0_37, %c0_38] : memref<1x64xf32, #tpu.memory_space<vmem>>, vector<1x64xf32>
    %49 = vector.broadcast %48 : vector<1x64xf32> to vector<8x64xf32>
    %50 = arith.addf %47, %49 : vector<8x64xf32>
    %51 = vector.extract_strided_slice %50 {offsets = [0, 0], sizes = [8, 16], strides = [1, 1]} : vector<8x64xf32> to vector<8x16xf32>
    %52 = vector.extract_strided_slice %50 {offsets = [0, 16], sizes = [8, 16], strides = [1, 1]} : vector<8x64xf32> to vector<8x16xf32>
    %53 = vector.extract_strided_slice %50 {offsets = [0, 32], sizes = [8, 16], strides = [1, 1]} : vector<8x64xf32> to vector<8x16xf32>
    %54 = vector.extract_strided_slice %50 {offsets = [0, 48], sizes = [8, 16], strides = [1, 1]} : vector<8x64xf32> to vector<8x16xf32>
    %c0_39 = arith.constant 0 : index
    %55 = memref.load %arg1[%c0_39] : memref<10xf32, #tpu.memory_space<smem>>
    %56 = vector.broadcast %55 : f32 to vector<8x16xf32>
    %57 = arith.mulf %56, %51 : vector<8x16xf32>
    %c1 = arith.constant 1 : index
    %58 = memref.load %arg1[%c1] : memref<10xf32, #tpu.memory_space<smem>>
    %59 = vector.broadcast %58 : f32 to vector<8x16xf32>
    %60 = arith.mulf %59, %52 : vector<8x16xf32>
    %61 = arith.addf %57, %60 : vector<8x16xf32>
    %c2 = arith.constant 2 : index
    %62 = memref.load %arg1[%c2] : memref<10xf32, #tpu.memory_space<smem>>
    %63 = vector.broadcast %62 : f32 to vector<8x16xf32>
    %64 = arith.mulf %63, %53 : vector<8x16xf32>
    %65 = arith.addf %61, %64 : vector<8x16xf32>
    %c3 = arith.constant 3 : index
    %66 = memref.load %arg1[%c3] : memref<10xf32, #tpu.memory_space<smem>>
    %67 = vector.broadcast %66 : f32 to vector<8x16xf32>
    %68 = arith.mulf %67, %54 : vector<8x16xf32>
    %69 = arith.addf %65, %68 : vector<8x16xf32>
    %c0_40 = arith.constant 0 : index
    %c0_41 = arith.constant 0 : index
    %70 = vector.load %arg16[%c0_40, %c0_41] : memref<16x16xbf16, #tpu.memory_space<vmem>>, vector<16x16xbf16>
    %71 = arith.truncf %69 : vector<8x16xf32> to vector<8x16xbf16>
    %cst_42 = arith.constant dense<0.000000e+00> : vector<8x16xf32>
    %72 = tpu.matmul %71, %70, %cst_42 {dimension_numbers = #tpu.dot_dimension_numbers<[1], [0], [0], [1], [0, 0, 1, 1], [], []>} : vector<8x16xbf16>, vector<16x16xbf16>, vector<8x16xf32> -> vector<8x16xf32>
    %c0_43 = arith.constant 0 : index
    %c0_44 = arith.constant 0 : index
    %73 = vector.load %arg17[%c0_43, %c0_44] : memref<1x16xf32, #tpu.memory_space<vmem>>, vector<1x16xf32>
    %74 = vector.broadcast %73 : vector<1x16xf32> to vector<8x16xf32>
    %75 = arith.addf %72, %74 : vector<8x16xf32>
    %cst_45 = arith.constant 0.000000e+00 : f32
    %76 = vector.broadcast %cst_45 : f32 to vector<8x16xf32>
    %77 = arith.maximumf %75, %76 : vector<8x16xf32>
    %c5 = arith.constant 5 : index
    %78 = memref.load %arg1[%c5] : memref<10xf32, #tpu.memory_space<smem>>
    %79 = vector.broadcast %78 : f32 to vector<8x16xf32>
    %80 = arith.mulf %79, %51 : vector<8x16xf32>
    %c6 = arith.constant 6 : index
    %81 = memref.load %arg1[%c6] : memref<10xf32, #tpu.memory_space<smem>>
    %82 = vector.broadcast %81 : f32 to vector<8x16xf32>
    %83 = arith.mulf %82, %52 : vector<8x16xf32>
    %84 = arith.addf %80, %83 : vector<8x16xf32>
    %c7 = arith.constant 7 : index
    %85 = memref.load %arg1[%c7] : memref<10xf32, #tpu.memory_space<smem>>
    %86 = vector.broadcast %85 : f32 to vector<8x16xf32>
    %87 = arith.mulf %86, %53 : vector<8x16xf32>
    %88 = arith.addf %84, %87 : vector<8x16xf32>
    %c8 = arith.constant 8 : index
    %89 = memref.load %arg1[%c8] : memref<10xf32, #tpu.memory_space<smem>>
    %90 = vector.broadcast %89 : f32 to vector<8x16xf32>
    %91 = arith.mulf %90, %54 : vector<8x16xf32>
    %92 = arith.addf %88, %91 : vector<8x16xf32>
    %c9 = arith.constant 9 : index
    %93 = memref.load %arg1[%c9] : memref<10xf32, #tpu.memory_space<smem>>
    %94 = vector.broadcast %93 : f32 to vector<8x16xf32>
    %95 = arith.mulf %94, %77 : vector<8x16xf32>
    %96 = arith.addf %92, %95 : vector<8x16xf32>
    %c0_46 = arith.constant 0 : index
    %c0_47 = arith.constant 0 : index
    %97 = vector.load %arg18[%c0_46, %c0_47] : memref<16x16xbf16, #tpu.memory_space<vmem>>, vector<16x16xbf16>
    %98 = arith.truncf %96 : vector<8x16xf32> to vector<8x16xbf16>
    %cst_48 = arith.constant dense<0.000000e+00> : vector<8x16xf32>
    %99 = tpu.matmul %98, %97, %cst_48 {dimension_numbers = #tpu.dot_dimension_numbers<[1], [0], [0], [1], [0, 0, 1, 1], [], []>} : vector<8x16xbf16>, vector<16x16xbf16>, vector<8x16xf32> -> vector<8x16xf32>
    %c0_49 = arith.constant 0 : index
    %c0_50 = arith.constant 0 : index
    %100 = vector.load %arg19[%c0_49, %c0_50] : memref<1x16xf32, #tpu.memory_space<vmem>>, vector<1x16xf32>
    %101 = vector.broadcast %100 : vector<1x16xf32> to vector<8x16xf32>
    %102 = arith.addf %99, %101 : vector<8x16xf32>
    %cst_51 = arith.constant 0.000000e+00 : f32
    %103 = vector.broadcast %cst_51 : f32 to vector<8x16xf32>
    %104 = arith.maximumf %102, %103 : vector<8x16xf32>
    %105 = tpu.concatenate %77, %104 in 1 : vector<8x16xf32>, vector<8x16xf32> -> vector<8x32xf32>
    %106 = vector.extract_strided_slice %105 {offsets = [0, 0], sizes = [1, 32], strides = [1, 1]} : vector<8x32xf32> to vector<1x32xf32>
    %107 = vector.extract_strided_slice %105 {offsets = [1, 0], sizes = [1, 32], strides = [1, 1]} : vector<8x32xf32> to vector<1x32xf32>
    %108 = vector.extract_strided_slice %105 {offsets = [2, 0], sizes = [1, 32], strides = [1, 1]} : vector<8x32xf32> to vector<1x32xf32>
    %109 = vector.extract_strided_slice %105 {offsets = [3, 0], sizes = [1, 32], strides = [1, 1]} : vector<8x32xf32> to vector<1x32xf32>
    %110 = vector.extract_strided_slice %105 {offsets = [4, 0], sizes = [1, 32], strides = [1, 1]} : vector<8x32xf32> to vector<1x32xf32>
    %111 = vector.extract_strided_slice %105 {offsets = [5, 0], sizes = [1, 32], strides = [1, 1]} : vector<8x32xf32> to vector<1x32xf32>
    %112 = vector.extract_strided_slice %105 {offsets = [6, 0], sizes = [1, 32], strides = [1, 1]} : vector<8x32xf32> to vector<1x32xf32>
    %113 = vector.extract_strided_slice %105 {offsets = [7, 0], sizes = [1, 32], strides = [1, 1]} : vector<8x32xf32> to vector<1x32xf32>
    %114 = tpu.concatenate %106, %107, %108, %109, %110, %111, %112, %113 in 1 : vector<1x32xf32>, vector<1x32xf32>, vector<1x32xf32>, vector<1x32xf32>, vector<1x32xf32>, vector<1x32xf32>, vector<1x32xf32>, vector<1x32xf32> -> vector<1x256xf32>
    %c0_52 = arith.constant 0 : index
    %c0_53 = arith.constant 0 : index
    %115 = vector.load %arg20[%c0_52, %c0_53] : memref<256x128xbf16, #tpu.memory_space<vmem>>, vector<256x128xbf16>
    %116 = arith.truncf %114 : vector<1x256xf32> to vector<1x256xbf16>
    %cst_54 = arith.constant dense<0.000000e+00> : vector<1x128xf32>
    %117 = tpu.matmul %116, %115, %cst_54 {dimension_numbers = #tpu.dot_dimension_numbers<[1], [0], [0], [1], [0, 0, 1, 1], [], []>} : vector<1x256xbf16>, vector<256x128xbf16>, vector<1x128xf32> -> vector<1x128xf32>
    %c0_55 = arith.constant 0 : index
    %c0_56 = arith.constant 0 : index
    %118 = vector.load %arg21[%c0_55, %c0_56] : memref<1x128xf32, #tpu.memory_space<vmem>>, vector<1x128xf32>
    %119 = arith.addf %117, %118 : vector<1x128xf32>
    %c0_57 = arith.constant 0 : index
    %c0_58 = arith.constant 0 : index
    %c0_59 = arith.constant 0 : index
    %120 = vector.load %arg22[%c0_57, %c0_58, %c0_59] : memref<1x1x128xf32, #tpu.memory_space<vmem>>, vector<1x1x128xf32>
    %121 = vector.shape_cast %120 : vector<1x1x128xf32> to vector<1x128xf32>
    %122 = vector.shape_cast %119 : vector<1x128xf32> to vector<1x1x128xf32>
    tpu.vector_store %arg22[%c0_57, %c0_58, %c0_59], %122 {strides = array<i32>} : memref<1x1x128xf32, #tpu.memory_space<vmem>>, vector<1x1x128xf32>,
    return
  }
  func.func @transform_0(%arg0: i32) -> i32 {
    %c0_i32 = arith.constant 0 : i32
    %c0_i32_0 = arith.constant 0 : i32
    return %c0_i32 : i32
  }
  func.func @transform_1(%arg0: i32) -> (i32, i32, i32) {
    %c0_i32 = arith.constant 0 : i32
    %c0_i32_0 = arith.constant 0 : i32
    %c0_i32_1 = arith.constant 0 : i32
    return %arg0, %c0_i32, %c0_i32_0 : i32, i32, i32
  }
  func.func @transform_2(%arg0: i32) -> (i32, i32, i32) {
    %c0_i32 = arith.constant 0 : i32
    %c0_i32_0 = arith.constant 0 : i32
    %c0_i32_1 = arith.constant 0 : i32
    return %arg0, %c0_i32, %c0_i32_0 : i32, i32, i32
  }
  func.func @transform_3(%arg0: i32) -> (i32, i32) {
    %c0_i32 = arith.constant 0 : i32
    %c0_i32_0 = arith.constant 0 : i32
    %c0_i32_1 = arith.constant 0 : i32
    return %c0_i32, %c0_i32_0 : i32, i32
  }
  func.func @transform_4(%arg0: i32) -> (i32, i32) {
    %c0_i32 = arith.constant 0 : i32
    %c0_i32_0 = arith.constant 0 : i32
    %c0_i32_1 = arith.constant 0 : i32
    return %c0_i32, %c0_i32_0 : i32, i32
  }
  func.func @transform_5(%arg0: i32) -> (i32, i32) {
    %c0_i32 = arith.constant 0 : i32
    %c0_i32_0 = arith.constant 0 : i32
    %c0_i32_1 = arith.constant 0 : i32
    return %c0_i32, %c0_i32_0 : i32, i32
  }
  func.func @transform_6(%arg0: i32) -> (i32, i32) {
    %c0_i32 = arith.constant 0 : i32
    %c0_i32_0 = arith.constant 0 : i32
    %c0_i32_1 = arith.constant 0 : i32
    return %c0_i32, %c0_i32_0 : i32, i32
  }
  func.func @transform_7(%arg0: i32) -> (i32, i32) {
    %c0_i32 = arith.constant 0 : i32
    %c0_i32_0 = arith.constant 0 : i32
    %c0_i32_1 = arith.constant 0 : i32
    return %c0_i32, %c0_i32_0 : i32, i32
  }
  func.func @transform_8(%arg0: i32) -> (i32, i32) {
    %c0_i32 = arith.constant 0 : i32
    %c0_i32_0 = arith.constant 0 : i32
    %c0_i32_1 = arith.constant 0 : i32
    return %c0_i32, %c0_i32_0 : i32, i32
  }
  func.func @transform_9(%arg0: i32) -> (i32, i32) {
    %c0_i32 = arith.constant 0 : i32
    %c0_i32_0 = arith.constant 0 : i32
    %c0_i32_1 = arith.constant 0 : i32
    return %c0_i32, %c0_i32_0 : i32, i32
  }
  func.func @transform_10(%arg0: i32) -> (i32, i32) {
    %c0_i32 = arith.constant 0 : i32
    %c0_i32_0 = arith.constant 0 : i32
    %c0_i32_1 = arith.constant 0 : i32
    return %c0_i32, %c0_i32_0 : i32, i32
  }
  func.func @transform_11(%arg0: i32) -> (i32, i32) {
    %c0_i32 = arith.constant 0 : i32
    %c0_i32_0 = arith.constant 0 : i32
    %c0_i32_1 = arith.constant 0 : i32
    return %c0_i32, %c0_i32_0 : i32, i32
  }
  func.func @transform_12(%arg0: i32) -> (i32, i32) {
    %c0_i32 = arith.constant 0 : i32
    %c0_i32_0 = arith.constant 0 : i32
    %c0_i32_1 = arith.constant 0 : i32
    return %c0_i32, %c0_i32_0 : i32, i32
  }
  func.func @transform_13(%arg0: i32) -> (i32, i32) {
    %c0_i32 = arith.constant 0 : i32
    %c0_i32_0 = arith.constant 0 : i32
    %c0_i32_1 = arith.constant 0 : i32
    return %c0_i32, %c0_i32_0 : i32, i32
  }
  func.func @transform_14(%arg0: i32) -> (i32, i32) {
    %c0_i32 = arith.constant 0 : i32
    %c0_i32_0 = arith.constant 0 : i32
    %c0_i32_1 = arith.constant 0 : i32
    return %c0_i32, %c0_i32_0 : i32, i32
  }
  func.func @transform_15(%arg0: i32) -> (i32, i32) {
    %c0_i32 = arith.constant 0 : i32
    %c0_i32_0 = arith.constant 0 : i32
    %c0_i32_1 = arith.constant 0 : i32
    return %c0_i32, %c0_i32_0 : i32, i32
  }
  func.func @transform_16(%arg0: i32) -> (i32, i32) {
    %c0_i32 = arith.constant 0 : i32
    %c0_i32_0 = arith.constant 0 : i32
    %c0_i32_1 = arith.constant 0 : i32
    return %c0_i32, %c0_i32_0 : i32, i32
  }
  func.func @transform_17(%arg0: i32) -> (i32, i32) {
    %c0_i32 = arith.constant 0 : i32
    %c0_i32_0 = arith.constant 0 : i32
    %c0_i32_1 = arith.constant 0 : i32
    return %c0_i32, %c0_i32_0 : i32, i32
  }
  func.func @transform_18(%arg0: i32) -> (i32, i32) {
    %c0_i32 = arith.constant 0 : i32
    %c0_i32_0 = arith.constant 0 : i32
    %c0_i32_1 = arith.constant 0 : i32
    return %c0_i32, %c0_i32_0 : i32, i32
  }
  func.func @transform_19(%arg0: i32) -> (i32, i32) {
    %c0_i32 = arith.constant 0 : i32
    %c0_i32_0 = arith.constant 0 : i32
    %c0_i32_1 = arith.constant 0 : i32
    return %c0_i32, %c0_i32_0 : i32, i32
  }
  func.func @transform_20(%arg0: i32) -> (i32, i32) {
    %c0_i32 = arith.constant 0 : i32
    %c0_i32_0 = arith.constant 0 : i32
    %c0_i32_1 = arith.constant 0 : i32
    return %c0_i32, %c0_i32_0 : i32, i32
  }
  func.func @transform_21(%arg0: i32) -> (i32, i32, i32) {
    %c0_i32 = arith.constant 0 : i32
    %c0_i32_0 = arith.constant 0 : i32
    %c0_i32_1 = arith.constant 0 : i32
    return %arg0, %c0_i32, %c0_i32_0 : i32, i32, i32
  }
}

</mosaic_0001>

<llo_original>
// kernel: searchable_image_text_net_forward.1
$region0: #{searchable_image_text_net_forward.1}
  #allocation0 [shape = 'u32[]', space=smem, size = 0x4, offset = 0x4, fixed_abs, tag = 'smem constant byte address 0x4 - core index']
  #allocation1 [shape = 'u32[144,128]{1,0:T(1,128)}', space=vmem, size = 0x12000, scoped, tag = 'internal scratch']
  %s0 = inlined_call_operand.vmem [shape: f32[10], index: 0, kind: input, shape index: {}]
  %s1 = inlined_call_operand.vmem [shape: f32[2,64,8], index: 1, kind: input, shape index: {}]
  %s2 = inlined_call_operand.vmem [shape: f32[2,16,16], index: 2, kind: input, shape index: {}]
  %s3 = inlined_call_operand.vmem [shape: bf16[8,8], index: 3, kind: input, shape index: {}]
  %s4 = inlined_call_operand.vmem [shape: f32[1,8], index: 4, kind: input, shape index: {}]
  %s5 = inlined_call_operand.vmem [shape: bf16[8,16], index: 5, kind: input, shape index: {}]
  %s6 = inlined_call_operand.vmem [shape: f32[1,16], index: 6, kind: input, shape index: {}]
  %s7 = inlined_call_operand.vmem [shape: bf16[16,12], index: 7, kind: input, shape index: {}]
  %s8 = inlined_call_operand.vmem [shape: f32[1,12], index: 8, kind: input, shape index: {}]
  %s9 = inlined_call_operand.vmem [shape: bf16[12,24], index: 9, kind: input, shape index: {}]
  %s10 = inlined_call_operand.vmem [shape: f32[1,24], index: 10, kind: input, shape index: {}]
  %s11 = inlined_call_operand.vmem [shape: bf16[8,64], index: 11, kind: input, shape index: {}]
  %s12 = inlined_call_operand.vmem [shape: bf16[8,16], index: 12, kind: input, shape index: {}]
  %s13 = inlined_call_operand.vmem [shape: bf16[60,64], index: 13, kind: input, shape index: {}]
  %s14 = inlined_call_operand.vmem [shape: f32[1,64], index: 14, kind: input, shape index: {}]
  %s15 = inlined_call_operand.vmem [shape: bf16[16,16], index: 15, kind: input, shape index: {}]
  %s16 = inlined_call_operand.vmem [shape: f32[1,16], index: 16, kind: input, shape index: {}]
  %s17 = inlined_call_operand.vmem [shape: bf16[16,16], index: 17, kind: input, shape index: {}]
  %s18 = inlined_call_operand.vmem [shape: f32[1,16], index: 18, kind: input, shape index: {}]
  %s19 = inlined_call_operand.vmem [shape: bf16[256,128], index: 19, kind: input, shape index: {}]
  %s20 = inlined_call_operand.vmem [shape: f32[1,128], index: 20, kind: input, shape index: {}]
  %s21 = inlined_call_operand.hbm [shape: f32[2,1,128], index: 21, kind: output, shape index: {}]
  %s22 = sld [smem:[#allocation0]]
  $region121: #{searchable_image_text_net_forward.1} parent=0
    _
  %s24 = ssub.s32 1, %s22
  %s25 = scalar_select 0, %s24, %s22
  $region1: #{searchable_image_text_net_forward.1} parent=0
    #allocation2 [shape = 'u8[512]{0}', space=smem, size = 0x200, scoped, tag = 'input window, operand 0, single buffered']
    #allocation3 [shape = 's32[2]{0}', space=sflag, size = 0x8, scoped, tag = 'scoped memory for searchable_image_text_net_forward.1']
    #allocation4 [shape = 's32[2]{0}', space=sflag, size = 0x8, scoped, tag = 'scoped memory for searchable_image_text_net_forward.1']
    #allocation5 [shape = 'u8[1024]{0}', space=vmem, size = 0x400, scoped, tag = 'output window, operand 0']
    %26 = vsyncpa [#allocation4], 0
    %27 = vsyncpa [#allocation3], 0
    %s28 = scalar_lea.sflag [#allocation3], 1
    %29 = vsyncpa %s28, 0
    loop: start=0, step=1, limit=4
    $region2: #{searchable_image_text_net_forward.1} parent=1 // loop_pre_header
      _
    $region3: #{searchable_image_text_net_forward.1} parent=1 // loop_header
      %s31 = sphi 0, %s35
      %p32 = scmp.ge.s32.totalorder %s31, 4
      %s39 = sphi 0, %s39
      %s41 = sphi 0, %s39
      %s42 = sphi 0, %s41
      %s56 = sphi 0, %s42
      %s62 = sphi 0, %s64
      %s65 = sphi 0, %s62
      %s66 = sphi 0, %s65
      %s82 = sphi 0, %s66
      %s88 = sphi 0, %s90
      %s91 = sphi 0, %s88
      %s92 = sphi 0, %s91
      %s108 = sphi 0, %s92
      %s112 = sphi 0, %s112
      %s114 = sphi 0, %s112
      %s115 = sphi 0, %s114
      %s129 = sphi 0, %s115
      %s133 = sphi 0, %s133
      %s135 = sphi 0, %s133
      %s136 = sphi 0, %s135
      %s150 = sphi 0, %s136
      %s154 = sphi 0, %s154
      %s156 = sphi 0, %s154
      %s157 = sphi 0, %s156
      %s171 = sphi 0, %s157
      %s175 = sphi 0, %s175
      %s177 = sphi 0, %s175
      %s178 = sphi 0, %s177
      %s192 = sphi 0, %s178
      %s196 = sphi 0, %s196
      %s198 = sphi 0, %s196
      %s199 = sphi 0, %s198
      %s213 = sphi 0, %s199
      %s217 = sphi 0, %s217
      %s219 = sphi 0, %s217
      %s220 = sphi 0, %s219
      %s234 = sphi 0, %s220
      %s238 = sphi 0, %s238
      %s240 = sphi 0, %s238
      %s241 = sphi 0, %s240
      %s255 = sphi 0, %s241
      %s259 = sphi 0, %s259
      %s261 = sphi 0, %s259
      %s262 = sphi 0, %s261
      %s276 = sphi 0, %s262
      %s280 = sphi 0, %s280
      %s282 = sphi 0, %s280
      %s283 = sphi 0, %s282
      %s297 = sphi 0, %s283
      %s301 = sphi 0, %s301
      %s303 = sphi 0, %s301
      %s304 = sphi 0, %s303
      %s318 = sphi 0, %s304
      %s322 = sphi 0, %s322
      %s324 = sphi 0, %s322
      %s325 = sphi 0, %s324
      %s339 = sphi 0, %s325
      %s343 = sphi 0, %s343
      %s345 = sphi 0, %s343
      %s346 = sphi 0, %s345
      %s360 = sphi 0, %s346
      %s364 = sphi 0, %s364
      %s366 = sphi 0, %s364
      %s367 = sphi 0, %s366
      %s381 = sphi 0, %s367
      %s385 = sphi 0, %s385
      %s387 = sphi 0, %s385
      %s388 = sphi 0, %s387
      %s402 = sphi 0, %s388
      %s406 = sphi 0, %s406
      %s408 = sphi 0, %s406
      %s409 = sphi 0, %s408
      %s423 = sphi 0, %s409
      %s427 = sphi 0, %s427
      %s429 = sphi 0, %s427
      %s430 = sphi 0, %s429
      %s444 = sphi 0, %s430
      %s448 = sphi 0, %s448
      %s450 = sphi 0, %s448
      %s451 = sphi 0, %s450
      %s465 = sphi 0, %s451
      %s469 = sphi 0, %s469
      %s471 = sphi 0, %s469
      %s472 = sphi 0, %s471
      %s486 = sphi 0, %s472
      %s492 = sphi 0, %s494
      %s495 = sphi 0, %s492
      %s496 = sphi 0, %s495
      %s512 = sphi 0, %s496
    $region4: #{searchable_image_text_net_forward.1} parent=1 // loop_header_branch
      %34 = sbr.rel (%p32) target = $region8
    $region5: #{searchable_image_text_net_forward.1} parent=1 // loop_body
      %s36 = ssub.s32 %s31, 1
      %s37 = ssub.s32 %s31, 2
      %s38 = sadd.s32 %s31, 1
      %s40 = sadd.s32 %s39, 1
      %p43 = scmp.eq.s32.totalorder %s31, 1
      %p44 = scmp.ne.s32.totalorder %s39, %s41
      %p45 = scmp.eq.s32.totalorder %s31, 0
      %p46 = por %p44, %p45
      %p47 = scmp.ne.s32.totalorder %s39, %s41
      %p48 = scmp.eq.s32.totalorder %s36, 1
      %p49 = por %p47, %p48
      %p50 = scmp.ne.s32.totalorder %s41, %s42
      %p51 = scmp.eq.s32.totalorder %s36, 0
      %p52 = por %p50, %p51
      %p53 = scmp.ne.s32.totalorder %s41, %s42
      %p54 = scmp.eq.s32.totalorder %s37, 1
      %p55 = por %p53, %p54
      %p57 = scmp.ne.s32.totalorder %s42, %s56
      %p58 = scmp.eq.s32.totalorder %s37, 0
      %p59 = por %p57, %p58
      %s60 = ssub.s32 %s31, %s38
      %p61 = scmp.eq.s32.totalorder %s60, 0
      %s63 = sadd.s32 %s62, 1
      %s64 = scalar_select %p61, %s62, %s63
      %p67 = pneg %p61
      %p68 = scmp.eq.s32.totalorder %s31, 1
      %p69 = por %p67, %p68
      %p70 = scmp.ne.s32.totalorder %s62, %s65
      %p71 = scmp.eq.s32.totalorder %s31, 0
      %p72 = por %p70, %p71
      %p73 = scmp.ne.s32.totalorder %s62, %s65
      %p74 = scmp.eq.s32.totalorder %s36, 1
      %p75 = por %p73, %p74
      %p76 = scmp.ne.s32.totalorder %s65, %s66
      %p77 = scmp.eq.s32.totalorder %s36, 0
      %p78 = por %p76, %p77
      %p79 = scmp.ne.s32.totalorder %s65, %s66
      %p80 = scmp.eq.s32.totalorder %s37, 1
      %p81 = por %p79, %p80
      %p83 = scmp.ne.s32.totalorder %s66, %s82
      %p84 = scmp.eq.s32.totalorder %s37, 0
      %p85 = por %p83, %p84
      %s86 = ssub.s32 %s31, %s38
      %p87 = scmp.eq.s32.totalorder %s86, 0
      %s89 = sadd.s32 %s88, 1
      %s90 = scalar_select %p87, %s88, %s89
      %p93 = pneg %p87
      %p94 = scmp.eq.s32.totalorder %s31, 1
      %p95 = por %p93, %p94
      %p96 = scmp.ne.s32.totalorder %s88, %s91
      %p97 = scmp.eq.s32.totalorder %s31, 0
      %p98 = por %p96, %p97
      %p99 = scmp.ne.s32.totalorder %s88, %s91
      %p100 = scmp.eq.s32.totalorder %s36, 1
      %p101 = por %p99, %p100
      %p102 = scmp.ne.s32.totalorder %s91, %s92
      %p103 = scmp.eq.s32.totalorder %s36, 0
      %p104 = por %p102, %p103
      %p105 = scmp.ne.s32.totalorder %s91, %s92
      %p106 = scmp.eq.s32.totalorder %s37, 1
      %p107 = por %p105, %p106
      %p109 = scmp.ne.s32.totalorder %s92, %s108
      %p110 = scmp.eq.s32.totalorder %s37, 0
      %p111 = por %p109, %p110
      %s113 = sadd.s32 %s112, 1
      %p116 = scmp.eq.s32.totalorder %s31, 1
      %p117 = scmp.ne.s32.totalorder %s112, %s114
      %p118 = scmp.eq.s32.totalorder %s31, 0
      %p119 = por %p117, %p118
      %p120 = scmp.ne.s32.totalorder %s112, %s114
      %p121 = scmp.eq.s32.totalorder %s36, 1
      %p122 = por %p120, %p121
      %p123 = scmp.ne.s32.totalorder %s114, %s115
      %p124 = scmp.eq.s32.totalorder %s36, 0
      %p125 = por %p123, %p124
      %p126 = scmp.ne.s32.totalorder %s114, %s115
      %p127 = scmp.eq.s32.totalorder %s37, 1
      %p128 = por %p126, %p127
      %p130 = scmp.ne.s32.totalorder %s115, %s129
      %p131 = scmp.eq.s32.totalorder %s37, 0
      %p132 = por %p130, %p131
      %s134 = sadd.s32 %s133, 1
      %p137 = scmp.eq.s32.totalorder %s31, 1
      %p138 = scmp.ne.s32.totalorder %s133, %s135
      %p139 = scmp.eq.s32.totalorder %s31, 0
      %p140 = por %p138, %p139
      %p141 = scmp.ne.s32.totalorder %s133, %s135
      %p142 = scmp.eq.s32.totalorder %s36, 1
      %p143 = por %p141, %p142
      %p144 = scmp.ne.s32.totalorder %s135, %s136
      %p145 = scmp.eq.s32.totalorder %s36, 0
      %p146 = por %p144, %p145
      %p147 = scmp.ne.s32.totalorder %s135, %s136
      %p148 = scmp.eq.s32.totalorder %s37, 1
      %p149 = por %p147, %p148
      %p151 = scmp.ne.s32.totalorder %s136, %s150
      %p152 = scmp.eq.s32.totalorder %s37, 0
      %p153 = por %p151, %p152
      %s155 = sadd.s32 %s154, 1
      %p158 = scmp.eq.s32.totalorder %s31, 1
      %p159 = scmp.ne.s32.totalorder %s154, %s156
      %p160 = scmp.eq.s32.totalorder %s31, 0
      %p161 = por %p159, %p160
      %p162 = scmp.ne.s32.totalorder %s154, %s156
      %p163 = scmp.eq.s32.totalorder %s36, 1
      %p164 = por %p162, %p163
      %p165 = scmp.ne.s32.totalorder %s156, %s157
      %p166 = scmp.eq.s32.totalorder %s36, 0
      %p167 = por %p165, %p166
      %p168 = scmp.ne.s32.totalorder %s156, %s157
      %p169 = scmp.eq.s32.totalorder %s37, 1
      %p170 = por %p168, %p169
      %p172 = scmp.ne.s32.totalorder %s157, %s171
      %p173 = scmp.eq.s32.totalorder %s37, 0
      %p174 = por %p172, %p173
      %s176 = sadd.s32 %s175, 1
      %p179 = scmp.eq.s32.totalorder %s31, 1
      %p180 = scmp.ne.s32.totalorder %s175, %s177
      %p181 = scmp.eq.s32.totalorder %s31, 0
      %p182 = por %p180, %p181
      %p183 = scmp.ne.s32.totalorder %s175, %s177
      %p184 = scmp.eq.s32.totalorder %s36, 1
      %p185 = por %p183, %p184
      %p186 = scmp.ne.s32.totalorder %s177, %s178
      %p187 = scmp.eq.s32.totalorder %s36, 0
      %p188 = por %p186, %p187
      %p189 = scmp.ne.s32.totalorder %s177, %s178
      %p190 = scmp.eq.s32.totalorder %s37, 1
      %p191 = por %p189, %p190
      %p193 = scmp.ne.s32.totalorder %s178, %s192
      %p194 = scmp.eq.s32.totalorder %s37, 0
      %p195 = por %p193, %p194
      %s197 = sadd.s32 %s196, 1
      %p200 = scmp.eq.s32.totalorder %s31, 1
      %p201 = scmp.ne.s32.totalorder %s196, %s198
      %p202 = scmp.eq.s32.totalorder %s31, 0
      %p203 = por %p201, %p202
      %p204 = scmp.ne.s32.totalorder %s196, %s198
      %p205 = scmp.eq.s32.totalorder %s36, 1
      %p206 = por %p204, %p205
      %p207 = scmp.ne.s32.totalorder %s198, %s199
      %p208 = scmp.eq.s32.totalorder %s36, 0
      %p209 = por %p207, %p208
      %p210 = scmp.ne.s32.totalorder %s198, %s199
      %p211 = scmp.eq.s32.totalorder %s37, 1
      %p212 = por %p210, %p211
      %p214 = scmp.ne.s32.totalorder %s199, %s213
      %p215 = scmp.eq.s32.totalorder %s37, 0
      %p216 = por %p214, %p215
      %s218 = sadd.s32 %s217, 1
      %p221 = scmp.eq.s32.totalorder %s31, 1
      %p222 = scmp.ne.s32.totalorder %s217, %s219
      %p223 = scmp.eq.s32.totalorder %s31, 0
      %p224 = por %p222, %p223
      %p225 = scmp.ne.s32.totalorder %s217, %s219
      %p226 = scmp.eq.s32.totalorder %s36, 1
      %p227 = por %p225, %p226
      %p228 = scmp.ne.s32.totalorder %s219, %s220
      %p229 = scmp.eq.s32.totalorder %s36, 0
      %p230 = por %p228, %p229
      %p231 = scmp.ne.s32.totalorder %s219, %s220
      %p232 = scmp.eq.s32.totalorder %s37, 1
      %p233 = por %p231, %p232
      %p235 = scmp.ne.s32.totalorder %s220, %s234
      %p236 = scmp.eq.s32.totalorder %s37, 0
      %p237 = por %p235, %p236
      %s239 = sadd.s32 %s238, 1
      %p242 = scmp.eq.s32.totalorder %s31, 1
      %p243 = scmp.ne.s32.totalorder %s238, %s240
      %p244 = scmp.eq.s32.totalorder %s31, 0
      %p245 = por %p243, %p244
      %p246 = scmp.ne.s32.totalorder %s238, %s240
      %p247 = scmp.eq.s32.totalorder %s36, 1
      %p248 = por %p246, %p247
      %p249 = scmp.ne.s32.totalorder %s240, %s241
      %p250 = scmp.eq.s32.totalorder %s36, 0
      %p251 = por %p249, %p250
      %p252 = scmp.ne.s32.totalorder %s240, %s241
      %p253 = scmp.eq.s32.totalorder %s37, 1
      %p254 = por %p252, %p253
      %p256 = scmp.ne.s32.totalorder %s241, %s255
      %p257 = scmp.eq.s32.totalorder %s37, 0
      %p258 = por %p256, %p257
      %s260 = sadd.s32 %s259, 1
      %p263 = scmp.eq.s32.totalorder %s31, 1
      %p264 = scmp.ne.s32.totalorder %s259, %s261
      %p265 = scmp.eq.s32.totalorder %s31, 0
      %p266 = por %p264, %p265
      %p267 = scmp.ne.s32.totalorder %s259, %s261
      %p268 = scmp.eq.s32.totalorder %s36, 1
      %p269 = por %p267, %p268
      %p270 = scmp.ne.s32.totalorder %s261, %s262
      %p271 = scmp.eq.s32.totalorder %s36, 0
      %p272 = por %p270, %p271
      %p273 = scmp.ne.s32.totalorder %s261, %s262
      %p274 = scmp.eq.s32.totalorder %s37, 1
      %p275 = por %p273, %p274
      %p277 = scmp.ne.s32.totalorder %s262, %s276
      %p278 = scmp.eq.s32.totalorder %s37, 0
      %p279 = por %p277, %p278
      %s281 = sadd.s32 %s280, 1
      %p284 = scmp.eq.s32.totalorder %s31, 1
      %p285 = scmp.ne.s32.totalorder %s280, %s282
      %p286 = scmp.eq.s32.totalorder %s31, 0
      %p287 = por %p285, %p286
      %p288 = scmp.ne.s32.totalorder %s280, %s282
      %p289 = scmp.eq.s32.totalorder %s36, 1
      %p290 = por %p288, %p289
      %p291 = scmp.ne.s32.totalorder %s282, %s283
      %p292 = scmp.eq.s32.totalorder %s36, 0
      %p293 = por %p291, %p292
      %p294 = scmp.ne.s32.totalorder %s282, %s283
      %p295 = scmp.eq.s32.totalorder %s37, 1
      %p296 = por %p294, %p295
      %p298 = scmp.ne.s32.totalorder %s283, %s297
      %p299 = scmp.eq.s32.totalorder %s37, 0
      %p300 = por %p298, %p299
      %s302 = sadd.s32 %s301, 1
      %p305 = scmp.eq.s32.totalorder %s31, 1
      %p306 = scmp.ne.s32.totalorder %s301, %s303
      %p307 = scmp.eq.s32.totalorder %s31, 0
      %p308 = por %p306, %p307
      %p309 = scmp.ne.s32.totalorder %s301, %s303
      %p310 = scmp.eq.s32.totalorder %s36, 1
      %p311 = por %p309, %p310
      %p312 = scmp.ne.s32.totalorder %s303, %s304
      %p313 = scmp.eq.s32.totalorder %s36, 0
      %p314 = por %p312, %p313
      %p315 = scmp.ne.s32.totalorder %s303, %s304
      %p316 = scmp.eq.s32.totalorder %s37, 1
      %p317 = por %p315, %p316
      %p319 = scmp.ne.s32.totalorder %s304, %s318
      %p320 = scmp.eq.s32.totalorder %s37, 0
      %p321 = por %p319, %p320
      %s323 = sadd.s32 %s322, 1
      %p326 = scmp.eq.s32.totalorder %s31, 1
      %p327 = scmp.ne.s32.totalorder %s322, %s324
      %p328 = scmp.eq.s32.totalorder %s31, 0
      %p329 = por %p327, %p328
      %p330 = scmp.ne.s32.totalorder %s322, %s324
      %p331 = scmp.eq.s32.totalorder %s36, 1
      %p332 = por %p330, %p331
      %p333 = scmp.ne.s32.totalorder %s324, %s325
      %p334 = scmp.eq.s32.totalorder %s36, 0
      %p335 = por %p333, %p334
      %p336 = scmp.ne.s32.totalorder %s324, %s325
      %p337 = scmp.eq.s32.totalorder %s37, 1
      %p338 = por %p336, %p337
      %p340 = scmp.ne.s32.totalorder %s325, %s339
      %p341 = scmp.eq.s32.totalorder %s37, 0
      %p342 = por %p340, %p341
      %s344 = sadd.s32 %s343, 1
      %p347 = scmp.eq.s32.totalorder %s31, 1
      %p348 = scmp.ne.s32.totalorder %s343, %s345
      %p349 = scmp.eq.s32.totalorder %s31, 0
      %p350 = por %p348, %p349
      %p351 = scmp.ne.s32.totalorder %s343, %s345
      %p352 = scmp.eq.s32.totalorder %s36, 1
      %p353 = por %p351, %p352
      %p354 = scmp.ne.s32.totalorder %s345, %s346
      %p355 = scmp.eq.s32.totalorder %s36, 0
      %p356 = por %p354, %p355
      %p357 = scmp.ne.s32.totalorder %s345, %s346
      %p358 = scmp.eq.s32.totalorder %s37, 1
      %p359 = por %p357, %p358
      %p361 = scmp.ne.s32.totalorder %s346, %s360
      %p362 = scmp.eq.s32.totalorder %s37, 0
      %p363 = por %p361, %p362
      %s365 = sadd.s32 %s364, 1
      %p368 = scmp.eq.s32.totalorder %s31, 1
      %p369 = scmp.ne.s32.totalorder %s364, %s366
      %p370 = scmp.eq.s32.totalorder %s31, 0
      %p371 = por %p369, %p370
      %p372 = scmp.ne.s32.totalorder %s364, %s366
      %p373 = scmp.eq.s32.totalorder %s36, 1
      %p374 = por %p372, %p373
      %p375 = scmp.ne.s32.totalorder %s366, %s367
      %p376 = scmp.eq.s32.totalorder %s36, 0
      %p377 = por %p375, %p376
      %p378 = scmp.ne.s32.totalorder %s366, %s367
      %p379 = scmp.eq.s32.totalorder %s37, 1
      %p380 = por %p378, %p379
      %p382 = scmp.ne.s32.totalorder %s367, %s381
      %p383 = scmp.eq.s32.totalorder %s37, 0
      %p384 = por %p382, %p383
      %s386 = sadd.s32 %s385, 1
      %p389 = scmp.eq.s32.totalorder %s31, 1
      %p390 = scmp.ne.s32.totalorder %s385, %s387
      %p391 = scmp.eq.s32.totalorder %s31, 0
      %p392 = por %p390, %p391
      %p393 = scmp.ne.s32.totalorder %s385, %s387
      %p394 = scmp.eq.s32.totalorder %s36, 1
      %p395 = por %p393, %p394
      %p396 = scmp.ne.s32.totalorder %s387, %s388
      %p397 = scmp.eq.s32.totalorder %s36, 0
      %p398 = por %p396, %p397
      %p399 = scmp.ne.s32.totalorder %s387, %s388
      %p400 = scmp.eq.s32.totalorder %s37, 1
      %p401 = por %p399, %p400
      %p403 = scmp.ne.s32.totalorder %s388, %s402
      %p404 = scmp.eq.s32.totalorder %s37, 0
      %p405 = por %p403, %p404
      %s407 = sadd.s32 %s406, 1
      %p410 = scmp.eq.s32.totalorder %s31, 1
      %p411 = scmp.ne.s32.totalorder %s406, %s408
      %p412 = scmp.eq.s32.totalorder %s31, 0
      %p413 = por %p411, %p412
      %p414 = scmp.ne.s32.totalorder %s406, %s408
      %p415 = scmp.eq.s32.totalorder %s36, 1
      %p416 = por %p414, %p415
      %p417 = scmp.ne.s32.totalorder %s408, %s409
      %p418 = scmp.eq.s32.totalorder %s36, 0
      %p419 = por %p417, %p418
      %p420 = scmp.ne.s32.totalorder %s408, %s409
      %p421 = scmp.eq.s32.totalorder %s37, 1
      %p422 = por %p420, %p421
      %p424 = scmp.ne.s32.totalorder %s409, %s423
      %p425 = scmp.eq.s32.totalorder %s37, 0
      %p426 = por %p424, %p425
      %s428 = sadd.s32 %s427, 1
      %p431 = scmp.eq.s32.totalorder %s31, 1
      %p432 = scmp.ne.s32.totalorder %s427, %s429
      %p433 = scmp.eq.s32.totalorder %s31, 0
      %p434 = por %p432, %p433
      %p435 = scmp.ne.s32.totalorder %s427, %s429
      %p436 = scmp.eq.s32.totalorder %s36, 1
      %p437 = por %p435, %p436
      %p438 = scmp.ne.s32.totalorder %s429, %s430
      %p439 = scmp.eq.s32.totalorder %s36, 0
      %p440 = por %p438, %p439
      %p441 = scmp.ne.s32.totalorder %s429, %s430
      %p442 = scmp.eq.s32.totalorder %s37, 1
      %p443 = por %p441, %p442
      %p445 = scmp.ne.s32.totalorder %s430, %s444
      %p446 = scmp.eq.s32.totalorder %s37, 0
      %p447 = por %p445, %p446
      %s449 = sadd.s32 %s448, 1
      %p452 = scmp.eq.s32.totalorder %s31, 1
      %p453 = scmp.ne.s32.totalorder %s448, %s450
      %p454 = scmp.eq.s32.totalorder %s31, 0
      %p455 = por %p453, %p454
      %p456 = scmp.ne.s32.totalorder %s448, %s450
      %p457 = scmp.eq.s32.totalorder %s36, 1
      %p458 = por %p456, %p457
      %p459 = scmp.ne.s32.totalorder %s450, %s451
      %p460 = scmp.eq.s32.totalorder %s36, 0
      %p461 = por %p459, %p460
      %p462 = scmp.ne.s32.totalorder %s450, %s451
      %p463 = scmp.eq.s32.totalorder %s37, 1
      %p464 = por %p462, %p463
      %p466 = scmp.ne.s32.totalorder %s451, %s465
      %p467 = scmp.eq.s32.totalorder %s37, 0
      %p468 = por %p466, %p467
      %s470 = sadd.s32 %s469, 1
      %p473 = scmp.eq.s32.totalorder %s31, 1
      %p474 = scmp.ne.s32.totalorder %s469, %s471
      %p475 = scmp.eq.s32.totalorder %s31, 0
      %p476 = por %p474, %p475
      %p477 = scmp.ne.s32.totalorder %s469, %s471
      %p478 = scmp.eq.s32.totalorder %s36, 1
      %p479 = por %p477, %p478
      %p480 = scmp.ne.s32.totalorder %s471, %s472
      %p481 = scmp.eq.s32.totalorder %s36, 0
      %p482 = por %p480, %p481
      %p483 = scmp.ne.s32.totalorder %s471, %s472
      %p484 = scmp.eq.s32.totalorder %s37, 1
      %p485 = por %p483, %p484
      %p487 = scmp.ne.s32.totalorder %s472, %s486
      %p488 = scmp.eq.s32.totalorder %s37, 0
      %p489 = por %p487, %p488
      %s490 = ssub.s32 %s31, %s38
      %p491 = scmp.eq.s32.totalorder %s490, 0
      %s493 = sadd.s32 %s492, 1
      %s494 = scalar_select %p491, %s492, %s493
      %p497 = pneg %p491
      %p498 = scmp.eq.s32.totalorder %s31, 1
      %p499 = por %p497, %p498
      %p500 = scmp.ne.s32.totalorder %s492, %s495
      %p501 = scmp.eq.s32.totalorder %s31, 0
      %p502 = por %p500, %p501
      %p503 = scmp.ne.s32.totalorder %s492, %s495
      %p504 = scmp.eq.s32.totalorder %s36, 1
      %p505 = por %p503, %p504
      %p506 = scmp.ne.s32.totalorder %s495, %s496
      %p507 = scmp.eq.s32.totalorder %s36, 0
      %p508 = por %p506, %p507
      %p509 = scmp.ne.s32.totalorder %s495, %s496
      %p510 = scmp.eq.s32.totalorder %s37, 1
      %p511 = por %p509, %p510
      %p513 = scmp.ne.s32.totalorder %s496, %s512
      %p514 = scmp.eq.s32.totalorder %s37, 0
      %p515 = por %p513, %p514
      %p516 = scmp.le.s32.totalorder 1, %s31
      %p517 = scmp.lt.s32.totalorder %s31, 3
      %p518 = pnand %p516, %p517
      %p519 = pneg %p518
      // Predicated region
      $region9: #{searchable_image_text_net_forward.1} parent=5 // pred_check
        _
      $region10: #{searchable_image_text_net_forward.1} parent=5 // pred_check_branch
        %521 = sbr.rel (%p518) target = $region12
      $region11: #{searchable_image_text_net_forward.1} parent=5 // pred_region
        %s522 = ssub.s32 %s31, 1
        // Predicated region
        $region13: #{searchable_image_text_net_forward.1} parent=11 // pred_check
          %p523 = pneg %p52
        $region14: #{searchable_image_text_net_forward.1} parent=11 // pred_check_branch
          %525 = sbr.rel (%p523) target = $region16
        $region15: #{searchable_image_text_net_forward.1} parent=11 // pred_region
          %s527 = ssub.s32 16, 16
          %528 = vsyncadd [#allocation4], %s527
          %s530 = sshll.u32 %s0, 4
          %s531 = int_to_ptr.vmem [resolvable:$true] %s530
          %533 = dma.vmem_to_smem %s531, 16, [#allocation2], [#allocation4]
        $region16: #{searchable_image_text_net_forward.1} parent=11 // pred_fallthru
          _
        // Predicated region
        $region17: #{searchable_image_text_net_forward.1} parent=11 // pred_check
          %p534 = pneg %p125
        $region18: #{searchable_image_text_net_forward.1} parent=11 // pred_check_branch
          %536 = sbr.rel (%p534) target = $region20
        $region19: #{searchable_image_text_net_forward.1} parent=11 // pred_region
          _
        $region20: #{searchable_image_text_net_forward.1} parent=11 // pred_fallthru
          _
        // Predicated region
        $region21: #{searchable_image_text_net_forward.1} parent=11 // pred_check
          %p537 = pneg %p146
        $region22: #{searchable_image_text_net_forward.1} parent=11 // pred_check_branch
          %539 = sbr.rel (%p537) target = $region24
        $region23: #{searchable_image_text_net_forward.1} parent=11 // pred_region
          _
        $region24: #{searchable_image_text_net_forward.1} parent=11 // pred_fallthru
          _
        // Predicated region
        $region25: #{searchable_image_text_net_forward.1} parent=11 // pred_check
          %p540 = pneg %p167
        $region26: #{searchable_image_text_net_forward.1} parent=11 // pred_check_branch
          %542 = sbr.rel (%p540) target = $region28
        $region27: #{searchable_image_text_net_forward.1} parent=11 // pred_region
          _
        $region28: #{searchable_image_text_net_forward.1} parent=11 // pred_fallthru
          _
        // Predicated region
        $region29: #{searchable_image_text_net_forward.1} parent=11 // pred_check
          %p543 = pneg %p188
        $region30: #{searchable_image_text_net_forward.1} parent=11 // pred_check_branch
          %545 = sbr.rel (%p543) target = $region32
        $region31: #{searchable_image_text_net_forward.1} parent=11 // pred_region
          _
        $region32: #{searchable_image_text_net_forward.1} parent=11 // pred_fallthru
          _
        // Predicated region
        $region33: #{searchable_image_text_net_forward.1} parent=11 // pred_check
          %p546 = pneg %p209
        $region34: #{searchable_image_text_net_forward.1} parent=11 // pred_check_branch
          %548 = sbr.rel (%p546) target = $region36
        $region35: #{searchable_image_text_net_forward.1} parent=11 // pred_region
          _
        $region36: #{searchable_image_text_net_forward.1} parent=11 // pred_fallthru
          _
        // Predicated region
        $region37: #{searchable_image_text_net_forward.1} parent=11 // pred_check
          %p549 = pneg %p230
        $region38: #{searchable_image_text_net_forward.1} parent=11 // pred_check_branch
          %551 = sbr.rel (%p549) target = $region40
        $region39: #{searchable_image_text_net_forward.1} parent=11 // pred_region
          _
        $region40: #{searchable_image_text_net_forward.1} parent=11 // pred_fallthru
          _
        // Predicated region
        $region41: #{searchable_image_text_net_forward.1} parent=11 // pred_check
          %p552 = pneg %p251
        $region42: #{searchable_image_text_net_forward.1} parent=11 // pred_check_branch
          %554 = sbr.rel (%p552) target = $region44
        $region43: #{searchable_image_text_net_forward.1} parent=11 // pred_region
          _
        $region44: #{searchable_image_text_net_forward.1} parent=11 // pred_fallthru
          _
        // Predicated region
        $region45: #{searchable_image_text_net_forward.1} parent=11 // pred_check
          %p555 = pneg %p272
        $region46: #{searchable_image_text_net_forward.1} parent=11 // pred_check_branch
          %557 = sbr.rel (%p555) target = $region48
        $region47: #{searchable_image_text_net_forward.1} parent=11 // pred_region
          _
        $region48: #{searchable_image_text_net_forward.1} parent=11 // pred_fallthru
          _
        // Predicated region
        $region49: #{searchable_image_text_net_forward.1} parent=11 // pred_check
          %p558 = pneg %p293
        $region50: #{searchable_image_text_net_forward.1} parent=11 // pred_check_branch
          %560 = sbr.rel (%p558) target = $region52
        $region51: #{searchable_image_text_net_forward.1} parent=11 // pred_region
          _
        $region52: #{searchable_image_text_net_forward.1} parent=11 // pred_fallthru
          _
        // Predicated region
        $region53: #{searchable_image_text_net_forward.1} parent=11 // pred_check
          %p561 = pneg %p314
        $region54: #{searchable_image_text_net_forward.1} parent=11 // pred_check_branch
          %563 = sbr.rel (%p561) target = $region56
        $region55: #{searchable_image_text_net_forward.1} parent=11 // pred_region
          _
        $region56: #{searchable_image_text_net_forward.1} parent=11 // pred_fallthru
          _
        // Predicated region
        $region57: #{searchable_image_text_net_forward.1} parent=11 // pred_check
          %p564 = pneg %p335
        $region58: #{searchable_image_text_net_forward.1} parent=11 // pred_check_branch
          %566 = sbr.rel (%p564) target = $region60
        $region59: #{searchable_image_text_net_forward.1} parent=11 // pred_region
          _
        $region60: #{searchable_image_text_net_forward.1} parent=11 // pred_fallthru
          _
        // Predicated region
        $region61: #{searchable_image_text_net_forward.1} parent=11 // pred_check
          %p567 = pneg %p356
        $region62: #{searchable_image_text_net_forward.1} parent=11 // pred_check_branch
          %569 = sbr.rel (%p567) target = $region64
        $region63: #{searchable_image_text_net_forward.1} parent=11 // pred_region
          _
        $region64: #{searchable_image_text_net_forward.1} parent=11 // pred_fallthru
          _
        // Predicated region
        $region65: #{searchable_image_text_net_forward.1} parent=11 // pred_check
          %p570 = pneg %p377
        $region66: #{searchable_image_text_net_forward.1} parent=11 // pred_check_branch
          %572 = sbr.rel (%p570) target = $region68
        $region67: #{searchable_image_text_net_forward.1} parent=11 // pred_region
          _
        $region68: #{searchable_image_text_net_forward.1} parent=11 // pred_fallthru
          _
        // Predicated region
        $region69: #{searchable_image_text_net_forward.1} parent=11 // pred_check
          %p573 = pneg %p398
        $region70: #{searchable_image_text_net_forward.1} parent=11 // pred_check_branch
          %575 = sbr.rel (%p573) target = $region72
        $region71: #{searchable_image_text_net_forward.1} parent=11 // pred_region
          _
        $region72: #{searchable_image_text_net_forward.1} parent=11 // pred_fallthru
          _
        // Predicated region
        $region73: #{searchable_image_text_net_forward.1} parent=11 // pred_check
          %p576 = pneg %p419
        $region74: #{searchable_image_text_net_forward.1} parent=11 // pred_check_branch
          %578 = sbr.rel (%p576) target = $region76
        $region75: #{searchable_image_text_net_forward.1} parent=11 // pred_region
          _
        $region76: #{searchable_image_text_net_forward.1} parent=11 // pred_fallthru
          _
        // Predicated region
        $region77: #{searchable_image_text_net_forward.1} parent=11 // pred_check
          %p579 = pneg %p440
        $region78: #{searchable_image_text_net_forward.1} parent=11 // pred_check_branch
          %581 = sbr.rel (%p579) target = $region80
        $region79: #{searchable_image_text_net_forward.1} parent=11 // pred_region
          _
        $region80: #{searchable_image_text_net_forward.1} parent=11 // pred_fallthru
          _
        // Predicated region
        $region81: #{searchable_image_text_net_forward.1} parent=11 // pred_check
          %p582 = pneg %p461
        $region82: #{searchable_image_text_net_forward.1} parent=11 // pred_check_branch
          %584 = sbr.rel (%p582) target = $region84
        $region83: #{searchable_image_text_net_forward.1} parent=11 // pred_region
          _
        $region84: #{searchable_image_text_net_forward.1} parent=11 // pred_fallthru
          _
        // Predicated region
        $region85: #{searchable_image_text_net_forward.1} parent=11 // pred_check
          %p585 = pneg %p482
        $region86: #{searchable_image_text_net_forward.1} parent=11 // pred_check_branch
          %587 = sbr.rel (%p585) target = $region88
        $region87: #{searchable_image_text_net_forward.1} parent=11 // pred_region
          _
        $region88: #{searchable_image_text_net_forward.1} parent=11 // pred_fallthru
          _
      $region12: #{searchable_image_text_net_forward.1} parent=5 // pred_fallthru
        _
      %p588 = scmp.lt.s32.totalorder %s31, 2
      // Predicated region
      $region89: #{searchable_image_text_net_forward.1} parent=5 // pred_check
        %p589 = pneg %p588
      $region90: #{searchable_image_text_net_forward.1} parent=5 // pred_check_branch
        %591 = sbr.rel (%p589) target = $region92
      $region91: #{searchable_image_text_net_forward.1} parent=5 // pred_region
        // Predicated region
        $region93: #{searchable_image_text_net_forward.1} parent=91 // pred_check
          %p592 = pneg %p72
        $region94: #{searchable_image_text_net_forward.1} parent=91 // pred_check_branch
          %594 = sbr.rel (%p592) target = $region96
        $region95: #{searchable_image_text_net_forward.1} parent=91 // pred_region
          %p595 = scmp.lt.s32.totalorder %s31, 1
          %s596 = scalar_select %p595, %s31, 1
          %s597 = smul.addr %s596, 8
          %s598 = smul.addr %s597, 8
          %s599 = scalar_lea.vmem %s1, %s598
        $region96: #{searchable_image_text_net_forward.1} parent=91 // pred_fallthru
          _
        // Predicated region
        $region97: #{searchable_image_text_net_forward.1} parent=91 // pred_check
          %p600 = pneg %p98
        $region98: #{searchable_image_text_net_forward.1} parent=91 // pred_check_branch
          %602 = sbr.rel (%p600) target = $region100
        $region99: #{searchable_image_text_net_forward.1} parent=91 // pred_region
          %p603 = scmp.lt.s32.totalorder %s31, 1
          %s604 = scalar_select %p603, %s31, 1
          %s605 = smul.addr %s604, 2
          %s606 = smul.addr %s605, 8
          %s607 = scalar_lea.vmem %s2, %s606
        $region100: #{searchable_image_text_net_forward.1} parent=91 // pred_fallthru
          _
      $region92: #{searchable_image_text_net_forward.1} parent=5 // pred_fallthru
        _
      %p608 = scmp.le.s32.totalorder 1, %s31
      %p609 = scmp.lt.s32.totalorder %s31, 3
      %p610 = pnand %p608, %p609
      %p611 = pneg %p610
      // Predicated region
      $region101: #{searchable_image_text_net_forward.1} parent=5 // pred_check
        _
      $region102: #{searchable_image_text_net_forward.1} parent=5 // pred_check_branch
        %613 = sbr.rel (%p610) target = $region104
      $region103: #{searchable_image_text_net_forward.1} parent=5 // pred_region
        %s614 = ssub.s32 %s31, 1
        // Predicated region
        $region105: #{searchable_image_text_net_forward.1} parent=103 // pred_check
          %p615 = pneg %p52
        $region106: #{searchable_image_text_net_forward.1} parent=103 // pred_check_branch
          %617 = sbr.rel (%p615) target = $region108
        $region107: #{searchable_image_text_net_forward.1} parent=103 // pred_region
          %618 = dma.done [#allocation4], 16
        $region108: #{searchable_image_text_net_forward.1} parent=103 // pred_fallthru
          _
        %619 = sfence
        %p620 = pneg %p52
        %p621 = pneg %p49
        %p622 = scmp.lt.s32.totalorder %s36, 1
        %s623 = scalar_select %p622, %s36, 1
        %s624 = smul.addr %s623, 8
        %s625 = smul.addr %s624, 8
        %s626 = scalar_lea.vmem %s1, %s625
        %p627 = pneg %p78
        %p628 = pneg %p75
        %p629 = scmp.lt.s32.totalorder %s36, 1
        %s630 = scalar_select %p629, %s36, 1
        %s631 = smul.addr %s630, 2
        %s632 = smul.addr %s631, 8
        %s633 = scalar_lea.vmem %s2, %s632
        %p634 = pneg %p104
        %p635 = pneg %p101
        %p636 = pneg %p125
        %p637 = pneg %p122
        %p638 = pneg %p146
        %p639 = pneg %p143
        %p640 = pneg %p167
        %p641 = pneg %p164
        %p642 = pneg %p188
        %p643 = pneg %p185
        %p644 = pneg %p209
        %p645 = pneg %p206
        %p646 = pneg %p230
        %p647 = pneg %p227
        %p648 = pneg %p251
        %p649 = pneg %p248
        %p650 = pneg %p272
        %p651 = pneg %p269
        %p652 = pneg %p293
        %p653 = pneg %p290
        %p654 = pneg %p314
        %p655 = pneg %p311
        %p656 = pneg %p335
        %p657 = pneg %p332
        %p658 = pneg %p356
        %p659 = pneg %p353
        %p660 = pneg %p377
        %p661 = pneg %p374
        %p662 = pneg %p398
        %p663 = pneg %p395
        %p664 = pneg %p419
        %p665 = pneg %p416
        %p666 = pneg %p440
        %p667 = pneg %p437
        %p668 = pneg %p461
        %p669 = pneg %p458
        %p670 = pneg %p482
        %p671 = pneg %p479
        %p672 = pneg %p508
        %p673 = pneg %p505
        %s674 = sand.u32 %s495, 1
        %s675 = scalar_lea.sflag [#allocation3], %s674
        %s676 = sand.u32 %s495, 1
        %s677 = scalar_lea.vmem [#allocation5], %s676
        %p678 = scmp.lt.s32.totalorder %s36, 1
        %s679 = scalar_select %p678, %s36, 1
        %s680 = smul.addr %s679, 8
        %s681 = smul.addr %s680, 8
        %s682 = scalar_lea.vmem %s1, %s681
        %p683 = scmp.lt.s32.totalorder %s36, 1
        %s684 = scalar_select %p683, %s36, 1
        %s685 = smul.addr %s684, 2
        %s686 = smul.addr %s685, 8
        %s687 = scalar_lea.vmem %s2, %s686
        %v689 = vld [vmem:[%s682] sm:$0xff]
        %v690 = vld [vmem:[%s682 + $0x8] sm:$0xff]
        %v691 = vld [vmem:[%s682 + $0x10] sm:$0xff]
        %v692 = vld [vmem:[%s682 + $0x18] sm:$0xff]
        %v693 = vld [vmem:[%s682 + $0x20] sm:$0xff]
        %v694 = vld [vmem:[%s682 + $0x28] sm:$0xff]
        %v695 = vld [vmem:[%s682 + $0x30] sm:$0xff]
        %v696 = vld [vmem:[%s682 + $0x38] sm:$0xff]
        %v697 = vld [vmem:[%s687] sm:$0xff]
        %v698 = vld [vmem:[%s687 + $0x8] sm:$0xff]
        %v699 = vld [vmem:[%s3] sm:$0xf]
        %v700 = vpack.c.bf16 %v690, %v689
        %v701 = vpack.c.bf16 %v692, %v691
        %v702 = vpack.c.bf16 %v694, %v693
        %v703 = vpack.c.bf16 %v696, %v695
        %v704 = vld [vmem:[%s4] sm:$0x1]
        %v706 = vlaneseq
        %v707 = vshrl.u32 %v706, 7
        %v708 = vsub.s32 0, %v707
        %v709 = vrot.slane %v704, %v708
        %vm711 = vcmask 64512
        %v713 = vsel %vm711, %v700, 0
        %v716 = vsel %vm711, %v701, 0
        %v719 = vsel %vm711, %v702, 0
        %v722 = vsel %vm711, %v703, 0
        %vm724 = vcmask 1043456
        %v726 = vsel %vm724, %v699, 0
        %728 = vmatprep.subr.bf16.mxu0 0
        %729 = vmatpush1.bf16.msra.mxu0 %v726
        %730 = vmatprep.subr.bf16.mxu0 0
        %731 = vmatpush1.bf16.msra.mxu0 0
        %732 = vmatprep.subr.bf16.mxu0 0
        %733 = vmatpush1.bf16.msra.mxu0 0
        %734 = vmatprep.subr.bf16.mxu0 0
        %735 = vmatpush1.bf16.msra.mxu0 0
        %736 = vmatprep.subr.bf16.mxu0 0
        %737 = vmatpush1.bf16.msra.mxu0 0
        %738 = vmatprep.subr.bf16.mxu0 0
        %739 = vmatpush1.bf16.msra.mxu0 0
        %740 = vmatprep.subr.bf16.mxu0 0
        %741 = vmatpush1.bf16.msra.mxu0 0
        %742 = vmatprep.subr.bf16.mxu0 0
        %743 = vmatpush1.bf16.msra.mxu0 0
        %744 = vmatprep.subr.bf16.mxu0 0
        %745 = vmatpush1.bf16.msra.mxu0 0
        %746 = vmatprep.subr.bf16.mxu0 0
        %747 = vmatpush1.bf16.msra.mxu0 0
        %748 = vmatprep.subr.bf16.mxu0 0
        %749 = vmatpush1.bf16.msra.mxu0 0
        %750 = vmatprep.subr.bf16.mxu0 0
        %751 = vmatpush1.bf16.msra.mxu0 0
        %752 = vmatprep.subr.bf16.mxu0 0
        %753 = vmatpush1.bf16.msra.mxu0 0
        %754 = vmatprep.subr.bf16.mxu0 0
        %755 = vmatpush1.bf16.msra.mxu0 0
        %756 = vmatprep.subr.bf16.mxu0 0
        %757 = vmatpush1.bf16.msra.mxu0 0
        %758 = vmatprep.subr.bf16.mxu0 0
        %759 = vmatpush1.bf16.msra.mxu0 0
        %760 = vmatprep.mubr.bf16.mxu0 0
        %761 = vmatmul.mubr.bf16.gmra.mrb[0].mxu0 %v713
        %v762 = vpop.f32.mrb[0].mxu0
        %v763 = vadd.f32 %v709, %v762
        %v764 = vpop.f32.mrb[0].mxu0
        %v765 = vpop.f32.mrb[0].mxu0
        %v766 = vadd.f32 %v709, %v765
        %v767 = vpop.f32.mrb[0].mxu0
        %768 = vmatprep.mubr.bf16.mxu0 0
        %769 = vmatmul.mubr.bf16.gmra.mrb[0].mxu0 %v716
        %v770 = vpop.f32.mrb[0].mxu0
        %v771 = vadd.f32 %v709, %v770
        %v772 = vpop.f32.mrb[0].mxu0
        %v773 = vpop.f32.mrb[0].mxu0
        %v774 = vadd.f32 %v709, %v773
        %v775 = vpop.f32.mrb[0].mxu0
        %776 = vmatprep.mubr.bf16.mxu0 0
        %777 = vmatmul.mubr.bf16.gmra.mrb[0].mxu0 %v719
        %v778 = vpop.f32.mrb[0].mxu0
        %v779 = vadd.f32 %v709, %v778
        %v780 = vpop.f32.mrb[0].mxu0
        %v781 = vpop.f32.mrb[0].mxu0
        %v782 = vadd.f32 %v709, %v781
        %v783 = vpop.f32.mrb[0].mxu0
        %784 = vmatprep.mubr.bf16.mxu0 0
        %785 = vmatmul.mubr.bf16.gmra.mrb[0].mxu0 %v722
        %v786 = vpop.f32.mrb[0].mxu0
        %v787 = vadd.f32 %v709, %v786
        %v788 = vpop.f32.mrb[0].mxu0
        %v789 = vpop.f32.mrb[0].mxu0
        %v790 = vadd.f32 %v709, %v789
        %v791 = vpop.f32.mrb[0].mxu0
        %792 = vdwg.mxu0
        %v793 = vmax.f32 %v763, 0.0
        %v794 = vmax.f32 %v766, 0.0
        %v795 = vmax.f32 %v771, 0.0
        %v796 = vmax.f32 %v774, 0.0
        %v797 = vmax.f32 %v779, 0.0
        %v798 = vmax.f32 %v782, 0.0
        %v799 = vmax.f32 %v787, 0.0
        %v800 = vmax.f32 %v790, 0.0
        %v801 = vld [vmem:[%s5] sm:$0xf]
        %v802 = vpack.c.bf16 %v794, %v793
        %v803 = vpack.c.bf16 %v796, %v795
        %v804 = vpack.c.bf16 %v798, %v797
        %v805 = vpack.c.bf16 %v800, %v799
        %v806 = vld [vmem:[%s6] sm:$0x1]
        %v808 = vlaneseq
        %v809 = vshrl.u32 %v808, 7
        %v810 = vsub.s32 0, %v809
        %v811 = vrot.slane %v806, %v810
        %v814 = vsel %vm711, %v802, 0
        %v817 = vsel %vm711, %v803, 0
        %v820 = vsel %vm711, %v804, 0
        %v823 = vsel %vm711, %v805, 0
        %v826 = vsel %vm724, %v801, 0
        %828 = vmatprep.subr.bf16.mxu0 0
        %829 = vmatpush1.bf16.msra.mxu0 %v826
        %830 = vmatprep.subr.bf16.mxu0 0
        %831 = vmatpush1.bf16.msra.mxu0 0
        %832 = vmatprep.subr.bf16.mxu0 0
        %833 = vmatpush1.bf16.msra.mxu0 0
        %834 = vmatprep.subr.bf16.mxu0 0
        %835 = vmatpush1.bf16.msra.mxu0 0
        %836 = vmatprep.subr.bf16.mxu0 0
        %837 = vmatpush1.bf16.msra.mxu0 0
        %838 = vmatprep.subr.bf16.mxu0 0
        %839 = vmatpush1.bf16.msra.mxu0 0
        %840 = vmatprep.subr.bf16.mxu0 0
        %841 = vmatpush1.bf16.msra.mxu0 0
        %842 = vmatprep.subr.bf16.mxu0 0
        %843 = vmatpush1.bf16.msra.mxu0 0
        %844 = vmatprep.subr.bf16.mxu0 0
        %845 = vmatpush1.bf16.msra.mxu0 0
        %846 = vmatprep.subr.bf16.mxu0 0
        %847 = vmatpush1.bf16.msra.mxu0 0
        %848 = vmatprep.subr.bf16.mxu0 0
        %849 = vmatpush1.bf16.msra.mxu0 0
        %850 = vmatprep.subr.bf16.mxu0 0
        %851 = vmatpush1.bf16.msra.mxu0 0
        %852 = vmatprep.subr.bf16.mxu0 0
        %853 = vmatpush1.bf16.msra.mxu0 0
        %854 = vmatprep.subr.bf16.mxu0 0
        %855 = vmatpush1.bf16.msra.mxu0 0
        %856 = vmatprep.subr.bf16.mxu0 0
        %857 = vmatpush1.bf16.msra.mxu0 0
        %858 = vmatprep.subr.bf16.mxu0 0
        %859 = vmatpush1.bf16.msra.mxu0 0
        %860 = vmatprep.mubr.bf16.mxu0 0
        %861 = vmatmul.mubr.bf16.gmra.mrb[0].mxu0 %v814
        %v862 = vpop.f32.mrb[0].mxu0
        %v863 = vadd.f32 %v811, %v862
        %v864 = vpop.f32.mrb[0].mxu0
        %v865 = vpop.f32.mrb[0].mxu0
        %v866 = vadd.f32 %v811, %v865
        %v867 = vpop.f32.mrb[0].mxu0
        %868 = vmatprep.mubr.bf16.mxu0 0
        %869 = vmatmul.mubr.bf16.gmra.mrb[0].mxu0 %v817
        %v870 = vpop.f32.mrb[0].mxu0
        %v871 = vadd.f32 %v811, %v870
        %v872 = vpop.f32.mrb[0].mxu0
        %v873 = vpop.f32.mrb[0].mxu0
        %v874 = vadd.f32 %v811, %v873
        %v875 = vpop.f32.mrb[0].mxu0
        %876 = vmatprep.mubr.bf16.mxu0 0
        %877 = vmatmul.mubr.bf16.gmra.mrb[0].mxu0 %v820
        %v878 = vpop.f32.mrb[0].mxu0
        %v879 = vadd.f32 %v811, %v878
        %v880 = vpop.f32.mrb[0].mxu0
        %v881 = vpop.f32.mrb[0].mxu0
        %v882 = vadd.f32 %v811, %v881
        %v883 = vpop.f32.mrb[0].mxu0
        %884 = vmatprep.mubr.bf16.mxu0 0
        %885 = vmatmul.mubr.bf16.gmra.mrb[0].mxu0 %v823
        %v886 = vpop.f32.mrb[0].mxu0
        %v887 = vadd.f32 %v811, %v886
        %v888 = vpop.f32.mrb[0].mxu0
        %v889 = vpop.f32.mrb[0].mxu0
        %v890 = vadd.f32 %v811, %v889
        %v891 = vpop.f32.mrb[0].mxu0
        %892 = vdwg.mxu0
        %v893 = vmax.f32 %v863, 0.0
        %v894 = vmax.f32 %v866, 0.0
        %v895 = vmax.f32 %v871, 0.0
        %v896 = vmax.f32 %v874, 0.0
        %v897 = vmax.f32 %v879, 0.0
        %v898 = vmax.f32 %v882, 0.0
        %v899 = vmax.f32 %v887, 0.0
        %v900 = vmax.f32 %v890, 0.0
        %v901 = vld [vmem:[%s7] sm:$0xf]
        %v902 = vld [vmem:[%s7 + $0x4] sm:$0xf]
        %v903 = vpack.c.bf16 %v698, %v697
        %v904 = vld [vmem:[%s8] sm:$0x1]
        %v906 = vlaneseq
        %v907 = vshrl.u32 %v906, 7
        %v908 = vsub.s32 0, %v907
        %v909 = vrot.slane %v904, %v908
        %v913 = vunpack.c.l.b16 %v901
        %v914 = vunpack.c.l.b16 %v902
        %v915 = vpack.c.b16 %v914, %v913
        %vm917 = vcmask 130048
        %v919 = vsel %vm917, %v903, 0
        %921 = vmatprep.subr.bf16.mxu0 0
        %922 = vmatpush1.bf16.msra.mxu0 %v915
        %923 = vmatprep.subr.bf16.mxu0 0
        %924 = vmatpush1.bf16.msra.mxu0 0
        %925 = vmatprep.subr.bf16.mxu0 0
        %926 = vmatpush1.bf16.msra.mxu0 0
        %927 = vmatprep.subr.bf16.mxu0 0
        %928 = vmatpush1.bf16.msra.mxu0 0
        %929 = vmatprep.subr.bf16.mxu0 0
        %930 = vmatpush1.bf16.msra.mxu0 0
        %931 = vmatprep.subr.bf16.mxu0 0
        %932 = vmatpush1.bf16.msra.mxu0 0
        %933 = vmatprep.subr.bf16.mxu0 0
        %934 = vmatpush1.bf16.msra.mxu0 0
        %935 = vmatprep.subr.bf16.mxu0 0
        %936 = vmatpush1.bf16.msra.mxu0 0
        %937 = vmatprep.subr.bf16.mxu0 0
        %938 = vmatpush1.bf16.msra.mxu0 0
        %939 = vmatprep.subr.bf16.mxu0 0
        %940 = vmatpush1.bf16.msra.mxu0 0
        %941 = vmatprep.subr.bf16.mxu0 0
        %942 = vmatpush1.bf16.msra.mxu0 0
        %943 = vmatprep.subr.bf16.mxu0 0
        %944 = vmatpush1.bf16.msra.mxu0 0
        %945 = vmatprep.subr.bf16.mxu0 0
        %946 = vmatpush1.bf16.msra.mxu0 0
        %947 = vmatprep.subr.bf16.mxu0 0
        %948 = vmatpush1.bf16.msra.mxu0 0
        %949 = vmatprep.subr.bf16.mxu0 0
        %950 = vmatpush1.bf16.msra.mxu0 0
        %951 = vmatprep.subr.bf16.mxu0 0
        %952 = vmatpush1.bf16.msra.mxu0 0
        %953 = vmatprep.mubr.bf16.mxu0 0
        %954 = vmatmul.mubr.bf16.gmra.mrb[0].mxu0 %v919
        %v955 = vpop.f32.mrb[0].mxu0
        %v956 = vadd.f32 %v909, %v955
        %v957 = vpop.f32.mrb[0].mxu0
        %v958 = vpop.f32.mrb[0].mxu0
        %v959 = vadd.f32 %v909, %v958
        %v960 = vpop.f32.mrb[0].mxu0
        %961 = vdwg.mxu0
        %v962 = vmax.f32 %v956, 0.0
        %v963 = vmax.f32 %v959, 0.0
        %v964 = vld [vmem:[%s9] sm:$0xf]
        %v965 = vld [vmem:[%s9 + $0x4] sm:$0x3]
        %v966 = vpack.c.bf16 %v963, %v962
        %v967 = vld [vmem:[%s10] sm:$0x1]
        %v969 = vlaneseq
        %v970 = vshrl.u32 %v969, 7
        %v971 = vsub.s32 0, %v970
        %v972 = vrot.slane %v967, %v971
        %v976 = vunpack.c.l.b16 %v964
        %v977 = vunpack.c.l.b16 %v965
        %v978 = vpack.c.b16 %v977, %v976
        %vm979 = vcmask 97280
        %v981 = vsel %vm979, %v966, 0
        %vm983 = vcmask 1045504
        %v985 = vsel %vm983, %v978, 0
        %987 = vmatprep.subr.bf16.mxu0 0
        %988 = vmatpush1.bf16.msra.mxu0 %v985
        %989 = vmatprep.subr.bf16.mxu0 0
        %990 = vmatpush1.bf16.msra.mxu0 0
        %991 = vmatprep.subr.bf16.mxu0 0
        %992 = vmatpush1.bf16.msra.mxu0 0
        %993 = vmatprep.subr.bf16.mxu0 0
        %994 = vmatpush1.bf16.msra.mxu0 0
        %995 = vmatprep.subr.bf16.mxu0 0
        %996 = vmatpush1.bf16.msra.mxu0 0
        %997 = vmatprep.subr.bf16.mxu0 0
        %998 = vmatpush1.bf16.msra.mxu0 0
        %999 = vmatprep.subr.bf16.mxu0 0
        %1000 = vmatpush1.bf16.msra.mxu0 0
        %1001 = vmatprep.subr.bf16.mxu0 0
        %1002 = vmatpush1.bf16.msra.mxu0 0
        %1003 = vmatprep.subr.bf16.mxu0 0
        %1004 = vmatpush1.bf16.msra.mxu0 0
        %1005 = vmatprep.subr.bf16.mxu0 0
        %1006 = vmatpush1.bf16.msra.mxu0 0
        %1007 = vmatprep.subr.bf16.mxu0 0
        %1008 = vmatpush1.bf16.msra.mxu0 0
        %1009 = vmatprep.subr.bf16.mxu0 0
        %1010 = vmatpush1.bf16.msra.mxu0 0
        %1011 = vmatprep.subr.bf16.mxu0 0
        %1012 = vmatpush1.bf16.msra.mxu0 0
        %1013 = vmatprep.subr.bf16.mxu0 0
        %1014 = vmatpush1.bf16.msra.mxu0 0
        %1015 = vmatprep.subr.bf16.mxu0 0
        %1016 = vmatpush1.bf16.msra.mxu0 0
        %1017 = vmatprep.subr.bf16.mxu0 0
        %1018 = vmatpush1.bf16.msra.mxu0 0
        %1019 = vmatprep.mubr.bf16.mxu0 0
        %1020 = vmatmul.mubr.bf16.gmra.mrb[0].mxu0 %v981
        %v1021 = vpop.f32.mrb[0].mxu0
        %v1022 = vadd.f32 %v972, %v1021
        %v1023 = vpop.f32.mrb[0].mxu0
        %v1024 = vpop.f32.mrb[0].mxu0
        %v1025 = vadd.f32 %v972, %v1024
        %v1026 = vpop.f32.mrb[0].mxu0
        %1027 = vdwg.mxu0
        %v1028 = vmax.f32 %v1022, 0.0
        %v1029 = vmax.f32 %v1025, 0.0
        %1038 = vrot.lane.b32.xlu0 %v893, 8
        %v1039 = vpop.permute.xlu0 %1038
        %1040 = vrot.lane.b32.xlu0 %v894, 8
        %v1041 = vpop.permute.xlu0 %1040
        %1042 = vrot.lane.b32.xlu0 %v895, 8
        %v1043 = vpop.permute.xlu0 %1042
        %1044 = vrot.lane.b32.xlu0 %v896, 8
        %v1045 = vpop.permute.xlu0 %1044
        %1046 = vrot.lane.b32.xlu0 %v897, 8
        %v1047 = vpop.permute.xlu0 %1046
        %1048 = vrot.lane.b32.xlu0 %v898, 8
        %v1049 = vpop.permute.xlu0 %1048
        %1050 = vrot.lane.b32.xlu0 %v899, 8
        %v1051 = vpop.permute.xlu0 %1050
        %1052 = vrot.lane.b32.xlu0 %v900, 8
        %v1053 = vpop.permute.xlu0 %1052
        %v1062 = vsel %vm711, %v793, %v1039
        %v1063 = vsel %vm711, %v794, %v1041
        %v1064 = vsel %vm711, %v795, %v1043
        %v1065 = vsel %vm711, %v796, %v1045
        %v1066 = vsel %vm711, %v797, %v1047
        %v1067 = vsel %vm711, %v798, %v1049
        %v1068 = vsel %vm711, %v799, %v1051
        %v1069 = vsel %vm711, %v800, %v1053
        %1072 = vrot.lane.b32.xlu0 %v1028, 12
        %v1073 = vpop.permute.xlu0 %1072
        %1074 = vrot.lane.b32.xlu0 %v1029, 12
        %v1075 = vpop.permute.xlu0 %1074
        %v1078 = vsel %vm979, %v962, %v1073
        %v1079 = vsel %vm979, %v963, %v1075
        %v1080 = vld [vmem:[%s11] sm:$0xf]
        %v1081 = vpack.c.bf16 %v1063, %v1062
        %v1082 = vpack.c.bf16 %v1065, %v1064
        %v1083 = vpack.c.bf16 %v1067, %v1066
        %v1084 = vpack.c.bf16 %v1069, %v1068
        %vm1085 = vcmask 523264
        %v1087 = vsel %vm1085, %v1080, 0
        %1089 = vmatprep.subr.bf16.mxu0 0
        %1090 = vmatpush1.bf16.msra.mxu0 %v1081
        %1091 = vmatprep.subr.bf16.mxu0 0
        %1092 = vmatpush1.bf16.msra.mxu0 %v1082
        %1093 = vmatprep.subr.bf16.mxu0 0
        %1094 = vmatpush1.bf16.msra.mxu0 %v1083
        %1095 = vmatprep.subr.bf16.mxu0 0
        %1096 = vmatpush1.bf16.msra.mxu0 %v1084
        %1097 = vmatprep.subr.bf16.mxu0 0
        %1098 = vmatpush1.bf16.msra.mxu0 0
        %1099 = vmatprep.subr.bf16.mxu0 0
        %1100 = vmatpush1.bf16.msra.mxu0 0
        %1101 = vmatprep.subr.bf16.mxu0 0
        %1102 = vmatpush1.bf16.msra.mxu0 0
        %1103 = vmatprep.subr.bf16.mxu0 0
        %1104 = vmatpush1.bf16.msra.mxu0 0
        %1105 = vmatprep.subr.bf16.mxu0 0
        %1106 = vmatpush1.bf16.msra.mxu0 0
        %1107 = vmatprep.subr.bf16.mxu0 0
        %1108 = vmatpush1.bf16.msra.mxu0 0
        %1109 = vmatprep.subr.bf16.mxu0 0
        %1110 = vmatpush1.bf16.msra.mxu0 0
        %1111 = vmatprep.subr.bf16.mxu0 0
        %1112 = vmatpush1.bf16.msra.mxu0 0
        %1113 = vmatprep.subr.bf16.mxu0 0
        %1114 = vmatpush1.bf16.msra.mxu0 0
        %1115 = vmatprep.subr.bf16.mxu0 0
        %1116 = vmatpush1.bf16.msra.mxu0 0
        %1117 = vmatprep.subr.bf16.mxu0 0
        %1118 = vmatpush1.bf16.msra.mxu0 0
        %1119 = vmatprep.subr.bf16.mxu0 0
        %1120 = vmatpush1.bf16.msra.mxu0 0
        %1121 = vmatprep.mubr.bf16.mxu0 0
        %1122 = vmatmul.mubr.bf16.gmra.mrb[0].mxu0 %v1087
        %v1123 = vpop.f32.mrb[0].mxu0
        %v1124 = vadd.f32 0.0, %v1123
        %v1125 = vpop.f32.mrb[0].mxu0
        %v1126 = vpop.f32.mrb[0].mxu0
        %v1127 = vpop.f32.mrb[0].mxu0
        %1128 = vdwg.mxu0
        %v1129 = vld [vmem:[%s12] sm:$0xf]
        %v1130 = vpack.c.bf16 %v1079, %v1078
        %v1132 = vsel %vm917, %v1129, 0
        %1134 = vmatprep.subr.bf16.mxu0 0
        %1135 = vmatpush1.bf16.msra.mxu0 %v1130
        %1136 = vmatprep.subr.bf16.mxu0 0
        %1137 = vmatpush1.bf16.msra.mxu0 0
        %1138 = vmatprep.subr.bf16.mxu0 0
        %1139 = vmatpush1.bf16.msra.mxu0 0
        %1140 = vmatprep.subr.bf16.mxu0 0
        %1141 = vmatpush1.bf16.msra.mxu0 0
        %1142 = vmatprep.subr.bf16.mxu0 0
        %1143 = vmatpush1.bf16.msra.mxu0 0
        %1144 = vmatprep.subr.bf16.mxu0 0
        %1145 = vmatpush1.bf16.msra.mxu0 0
        %1146 = vmatprep.subr.bf16.mxu0 0
        %1147 = vmatpush1.bf16.msra.mxu0 0
        %1148 = vmatprep.subr.bf16.mxu0 0
        %1149 = vmatpush1.bf16.msra.mxu0 0
        %1150 = vmatprep.subr.bf16.mxu0 0
        %1151 = vmatpush1.bf16.msra.mxu0 0
        %1152 = vmatprep.subr.bf16.mxu0 0
        %1153 = vmatpush1.bf16.msra.mxu0 0
        %1154 = vmatprep.subr.bf16.mxu0 0
        %1155 = vmatpush1.bf16.msra.mxu0 0
        %1156 = vmatprep.subr.bf16.mxu0 0
        %1157 = vmatpush1.bf16.msra.mxu0 0
        %1158 = vmatprep.subr.bf16.mxu0 0
        %1159 = vmatpush1.bf16.msra.mxu0 0
        %1160 = vmatprep.subr.bf16.mxu0 0
        %1161 = vmatpush1.bf16.msra.mxu0 0
        %1162 = vmatprep.subr.bf16.mxu0 0
        %1163 = vmatpush1.bf16.msra.mxu0 0
        %1164 = vmatprep.subr.bf16.mxu0 0
        %1165 = vmatpush1.bf16.msra.mxu0 0
        %1166 = vmatprep.mubr.bf16.mxu0 0
        %1167 = vmatmul.mubr.bf16.gmra.mrb[0].mxu0 %v1132
        %v1168 = vpop.f32.mrb[0].mxu0
        %v1169 = vadd.f32 0.0, %v1168
        %v1170 = vpop.f32.mrb[0].mxu0
        %v1171 = vpop.f32.mrb[0].mxu0
        %v1172 = vpop.f32.mrb[0].mxu0
        %1173 = vdwg.mxu0
        %1175 = vrot.lane.b32.xlu0 %v1169, 24
        %v1176 = vpop.permute.xlu0 %1175
        %vm1178 = vcmask 195584
        %v1179 = vsel %vm1178, %v1124, %v1176
        %v1180 = vld [vmem:[%s13] sm:$0xf]
        %v1181 = vld [vmem:[%s13 + $0x4] sm:$0xf]
        %v1182 = vld [vmem:[%s13 + $0x8] sm:$0xf]
        %v1183 = vld [vmem:[%s13 + $0xc] sm:$0xf]
        %v1184 = vld [vmem:[%s13 + $0x10] sm:$0xf]
        %v1185 = vld [vmem:[%s13 + $0x14] sm:$0xf]
        %v1186 = vld [vmem:[%s13 + $0x18] sm:$0xf]
        %v1187 = vld [vmem:[%s13 + $0x1c] sm:$0x3]
        %v1188 = vpack.c.bf16 %v1179, %v1179
        %v1189 = vld [vmem:[%s14] sm:$0x1]
        %v1191 = vlaneseq
        %v1192 = vshrl.u32 %v1191, 7
        %v1193 = vsub.s32 0, %v1192
        %v1194 = vrot.slane %v1189, %v1193
        %v1204 = vunpack.c.l.b16 %v1180
        %v1205 = vunpack.c.l.b16 %v1181
        %v1206 = vunpack.c.l.b16 %v1182
        %v1207 = vunpack.c.l.b16 %v1183
        %v1208 = vunpack.c.l.b16 %v1184
        %v1209 = vunpack.c.l.b16 %v1185
        %v1210 = vunpack.c.l.b16 %v1186
        %v1211 = vunpack.c.l.b16 %v1187
        %v1212 = vpack.c.b16 %v1205, %v1204
        %v1213 = vpack.c.b16 %v1207, %v1206
        %v1214 = vpack.c.b16 %v1209, %v1208
        %v1215 = vpack.c.b16 %v1211, %v1210
        %vm1219 = vcmask 490496
        %v1221 = vsel %vm1219, %v1188, 0
        %v1224 = vsel %vm983, %v1215, 0
        %1226 = vmatprep.subr.bf16.mxu0 0
        %1227 = vmatpush1.bf16.msra.mxu0 %v1212
        %1228 = vmatprep.subr.bf16.mxu0 0
        %1229 = vmatpush1.bf16.msra.mxu0 %v1213
        %1230 = vmatprep.subr.bf16.mxu0 0
        %1231 = vmatpush1.bf16.msra.mxu0 %v1214
        %1232 = vmatprep.subr.bf16.mxu0 0
        %1233 = vmatpush1.bf16.msra.mxu0 %v1224
        %1234 = vmatprep.subr.bf16.mxu0 0
        %1235 = vmatpush1.bf16.msra.mxu0 0
        %1236 = vmatprep.subr.bf16.mxu0 0
        %1237 = vmatpush1.bf16.msra.mxu0 0
        %1238 = vmatprep.subr.bf16.mxu0 0
        %1239 = vmatpush1.bf16.msra.mxu0 0
        %1240 = vmatprep.subr.bf16.mxu0 0
        %1241 = vmatpush1.bf16.msra.mxu0 0
        %1242 = vmatprep.subr.bf16.mxu0 0
        %1243 = vmatpush1.bf16.msra.mxu0 0
        %1244 = vmatprep.subr.bf16.mxu0 0
        %1245 = vmatpush1.bf16.msra.mxu0 0
        %1246 = vmatprep.subr.bf16.mxu0 0
        %1247 = vmatpush1.bf16.msra.mxu0 0
        %1248 = vmatprep.subr.bf16.mxu0 0
        %1249 = vmatpush1.bf16.msra.mxu0 0
        %1250 = vmatprep.subr.bf16.mxu0 0
        %1251 = vmatpush1.bf16.msra.mxu0 0
        %1252 = vmatprep.subr.bf16.mxu0 0
        %1253 = vmatpush1.bf16.msra.mxu0 0
        %1254 = vmatprep.subr.bf16.mxu0 0
        %1255 = vmatpush1.bf16.msra.mxu0 0
        %1256 = vmatprep.subr.bf16.mxu0 0
        %1257 = vmatpush1.bf16.msra.mxu0 0
        %1258 = vmatprep.mubr.bf16.mxu0 0
        %1259 = vmatmul.mubr.bf16.gmra.mrb[0].mxu0 %v1221
        %v1260 = vpop.f32.mrb[0].mxu0
        %v1261 = vadd.f32 %v1194, %v1260
        %v1262 = vpop.f32.mrb[0].mxu0
        %v1263 = vpop.f32.mrb[0].mxu0
        %v1264 = vpop.f32.mrb[0].mxu0
        %1265 = vdwg.mxu0
        %s1266 = sld [smem:[#allocation2]]
        %v1267 = vstv %s1266
        %v1268 = vmul.f32 %v1267, %v1261
        %s1269 = sld [smem:[#allocation2 + $0x1]]
        %v1270 = vstv %s1269
        %v1271 = vmul.f32 %v1270, %v1261
        %1273 = vrot.lane.b32.xlu0 %v1271, 112
        %v1274 = vpop.permute.xlu0 %1273
        %v1276 = vadd.f32 %v1268, %v1274
        %s1277 = sld [smem:[#allocation2 + $0x2]]
        %v1278 = vstv %s1277
        %v1279 = vmul.f32 %v1278, %v1261
        %1281 = vrot.lane.b32.xlu0 %v1279, 96
        %v1282 = vpop.permute.xlu0 %1281
        %v1284 = vadd.f32 %v1276, %v1282
        %s1285 = sld [smem:[#allocation2 + $0x3]]
        %v1286 = vstv %s1285
        %v1287 = vmul.f32 %v1286, %v1261
        %1289 = vrot.lane.b32.xlu0 %v1287, 80
        %v1290 = vpop.permute.xlu0 %1289
        %v1292 = vadd.f32 %v1284, %v1290
        %v1293 = vld [vmem:[%s15] sm:$0xf]
        %v1294 = vld [vmem:[%s15 + $0x4] sm:$0xf]
        %v1295 = vpack.c.bf16 %v1292, %v1292
        %v1296 = vld [vmem:[%s16] sm:$0x1]
        %v1298 = vlaneseq
        %v1299 = vshrl.u32 %v1298, 7
        %v1300 = vsub.s32 0, %v1299
        %v1301 = vrot.slane %v1296, %v1300
        %v1305 = vunpack.c.l.b16 %v1293
        %v1306 = vunpack.c.l.b16 %v1294
        %v1307 = vpack.c.b16 %v1306, %v1305
        %v1310 = vsel %vm917, %v1295, 0
        %1312 = vmatprep.subr.bf16.mxu0 0
        %1313 = vmatpush1.bf16.msra.mxu0 %v1307
        %1314 = vmatprep.subr.bf16.mxu0 0
        %1315 = vmatpush1.bf16.msra.mxu0 0
        %1316 = vmatprep.subr.bf16.mxu0 0
        %1317 = vmatpush1.bf16.msra.mxu0 0
        %1318 = vmatprep.subr.bf16.mxu0 0
        %1319 = vmatpush1.bf16.msra.mxu0 0
        %1320 = vmatprep.subr.bf16.mxu0 0
        %1321 = vmatpush1.bf16.msra.mxu0 0
        %1322 = vmatprep.subr.bf16.mxu0 0
        %1323 = vmatpush1.bf16.msra.mxu0 0
        %1324 = vmatprep.subr.bf16.mxu0 0
        %1325 = vmatpush1.bf16.msra.mxu0 0
        %1326 = vmatprep.subr.bf16.mxu0 0
        %1327 = vmatpush1.bf16.msra.mxu0 0
        %1328 = vmatprep.subr.bf16.mxu0 0
        %1329 = vmatpush1.bf16.msra.mxu0 0
        %1330 = vmatprep.subr.bf16.mxu0 0
        %1331 = vmatpush1.bf16.msra.mxu0 0
        %1332 = vmatprep.subr.bf16.mxu0 0
        %1333 = vmatpush1.bf16.msra.mxu0 0
        %1334 = vmatprep.subr.bf16.mxu0 0
        %1335 = vmatpush1.bf16.msra.mxu0 0
        %1336 = vmatprep.subr.bf16.mxu0 0
        %1337 = vmatpush1.bf16.msra.mxu0 0
        %1338 = vmatprep.subr.bf16.mxu0 0
        %1339 = vmatpush1.bf16.msra.mxu0 0
        %1340 = vmatprep.subr.bf16.mxu0 0
        %1341 = vmatpush1.bf16.msra.mxu0 0
        %1342 = vmatprep.subr.bf16.mxu0 0
        %1343 = vmatpush1.bf16.msra.mxu0 0
        %1344 = vmatprep.mubr.bf16.mxu0 0
        %1345 = vmatmul.mubr.bf16.gmra.mrb[0].mxu0 %v1310
        %v1346 = vpop.f32.mrb[0].mxu0
        %v1347 = vadd.f32 %v1301, %v1346
        %v1348 = vpop.f32.mrb[0].mxu0
        %v1349 = vpop.f32.mrb[0].mxu0
        %v1350 = vpop.f32.mrb[0].mxu0
        %1351 = vdwg.mxu0
        %v1352 = vmax.f32 %v1347, 0.0
        %s1353 = sld [smem:[#allocation2 + $0x5]]
        %v1354 = vstv %s1353
        %v1355 = vmul.f32 %v1354, %v1261
        %s1356 = sld [smem:[#allocation2 + $0x6]]
        %v1357 = vstv %s1356
        %v1358 = vmul.f32 %v1357, %v1261
        %1360 = vrot.lane.b32.xlu0 %v1358, 112
        %v1361 = vpop.permute.xlu0 %1360
        %v1363 = vadd.f32 %v1355, %v1361
        %s1364 = sld [smem:[#allocation2 + $0x7]]
        %v1365 = vstv %s1364
        %v1366 = vmul.f32 %v1365, %v1261
        %1368 = vrot.lane.b32.xlu0 %v1366, 96
        %v1369 = vpop.permute.xlu0 %1368
        %v1371 = vadd.f32 %v1363, %v1369
        %s1372 = sld [smem:[#allocation2 + $0x8]]
        %v1373 = vstv %s1372
        %v1374 = vmul.f32 %v1373, %v1261
        %1376 = vrot.lane.b32.xlu0 %v1374, 80
        %v1377 = vpop.permute.xlu0 %1376
        %v1379 = vadd.f32 %v1371, %v1377
        %s1380 = sld [smem:[#allocation2 + $0x9]]
        %v1381 = vstv %s1380
        %v1382 = vmul.f32 %v1381, %v1352
        %v1383 = vadd.f32 %v1379, %v1382
        %v1384 = vld [vmem:[%s17] sm:$0xf]
        %v1385 = vld [vmem:[%s17 + $0x4] sm:$0xf]
        %v1386 = vpack.c.bf16 %v1383, %v1383
        %v1387 = vld [vmem:[%s18] sm:$0x1]
        %v1389 = vlaneseq
        %v1390 = vshrl.u32 %v1389, 7
        %v1391 = vsub.s32 0, %v1390
        %v1392 = vrot.slane %v1387, %v1391
        %v1396 = vunpack.c.l.b16 %v1384
        %v1397 = vunpack.c.l.b16 %v1385
        %v1398 = vpack.c.b16 %v1397, %v1396
        %v1401 = vsel %vm917, %v1386, 0
        %1403 = vmatprep.subr.bf16.mxu0 0
        %1404 = vmatpush1.bf16.msra.mxu0 %v1398
        %1405 = vmatprep.subr.bf16.mxu0 0
        %1406 = vmatpush1.bf16.msra.mxu0 0
        %1407 = vmatprep.subr.bf16.mxu0 0
        %1408 = vmatpush1.bf16.msra.mxu0 0
        %1409 = vmatprep.subr.bf16.mxu0 0
        %1410 = vmatpush1.bf16.msra.mxu0 0
        %1411 = vmatprep.subr.bf16.mxu0 0
        %1412 = vmatpush1.bf16.msra.mxu0 0
        %1413 = vmatprep.subr.bf16.mxu0 0
        %1414 = vmatpush1.bf16.msra.mxu0 0
        %1415 = vmatprep.subr.bf16.mxu0 0
        %1416 = vmatpush1.bf16.msra.mxu0 0
        %1417 = vmatprep.subr.bf16.mxu0 0
        %1418 = vmatpush1.bf16.msra.mxu0 0
        %1419 = vmatprep.subr.bf16.mxu0 0
        %1420 = vmatpush1.bf16.msra.mxu0 0
        %1421 = vmatprep.subr.bf16.mxu0 0
        %1422 = vmatpush1.bf16.msra.mxu0 0
        %1423 = vmatprep.subr.bf16.mxu0 0
        %1424 = vmatpush1.bf16.msra.mxu0 0
        %1425 = vmatprep.subr.bf16.mxu0 0
        %1426 = vmatpush1.bf16.msra.mxu0 0
        %1427 = vmatprep.subr.bf16.mxu0 0
        %1428 = vmatpush1.bf16.msra.mxu0 0
        %1429 = vmatprep.subr.bf16.mxu0 0
        %1430 = vmatpush1.bf16.msra.mxu0 0
        %1431 = vmatprep.subr.bf16.mxu0 0
        %1432 = vmatpush1.bf16.msra.mxu0 0
        %1433 = vmatprep.subr.bf16.mxu0 0
        %1434 = vmatpush1.bf16.msra.mxu0 0
        %1435 = vmatprep.mubr.bf16.mxu0 0
        %1436 = vmatmul.mubr.bf16.gmra.mrb[0].mxu0 %v1401
        %v1437 = vpop.f32.mrb[0].mxu0
        %v1438 = vadd.f32 %v1392, %v1437
        %v1439 = vpop.f32.mrb[0].mxu0
        %v1440 = vpop.f32.mrb[0].mxu0
        %v1441 = vpop.f32.mrb[0].mxu0
        %1442 = vdwg.mxu0
        %v1443 = vmax.f32 %v1438, 0.0
        %1445 = vrot.lane.b32.xlu0 %v1443, 16
        %v1446 = vpop.permute.xlu0 %1445
        %v1448 = vsel %vm917, %v1352, %v1446
        %v1450 = vrot.slane %v1448, 1
        %1451 = vrot.lane.b32.xlu0 %v1450, 32
        %v1452 = vpop.permute.xlu0 %1451
        %v1454 = vrot.slane %v1448, 2
        %1455 = vrot.lane.b32.xlu0 %v1454, 64
        %v1456 = vpop.permute.xlu0 %1455
        %v1458 = vrot.slane %v1448, 3
        %1459 = vrot.lane.b32.xlu0 %v1458, 96
        %v1460 = vpop.permute.xlu0 %1459
        %v1462 = vrot.slane %v1448, 4
        %v1464 = vrot.slane %v1448, 5
        %1465 = vrot.lane.b32.xlu0 %v1464, 32
        %v1466 = vpop.permute.xlu0 %1465
        %v1468 = vrot.slane %v1448, 6
        %1469 = vrot.lane.b32.xlu0 %v1468, 64
        %v1470 = vpop.permute.xlu0 %1469
        %v1472 = vrot.slane %v1448, 7
        %1473 = vrot.lane.b32.xlu0 %v1472, 96
        %v1474 = vpop.permute.xlu0 %1473
        %vm1476 = vcmask 261120
        %v1477 = vsel %vm1476, %v1448, %v1452
        %v1478 = vsel %vm1085, %v1477, %v1456
        %vm1479 = vcmask 785408
        %v1480 = vsel %vm1479, %v1478, %v1460
        %v1481 = vsel %vm1476, %v1462, %v1466
        %v1482 = vsel %vm1085, %v1481, %v1470
        %v1483 = vsel %vm1479, %v1482, %v1474
        %v1484 = vld [vmem:[%s19] sm:$0xf]
        %v1485 = vld [vmem:[%s19 + $0x4] sm:$0xf]
        %v1486 = vld [vmem:[%s19 + $0x8] sm:$0xf]
        %v1487 = vld [vmem:[%s19 + $0xc] sm:$0xf]
        %v1488 = vld [vmem:[%s19 + $0x10] sm:$0xf]
        %v1489 = vld [vmem:[%s19 + $0x14] sm:$0xf]
        %v1490 = vld [vmem:[%s19 + $0x18] sm:$0xf]
        %v1491 = vld [vmem:[%s19 + $0x1c] sm:$0xf]
        %v1492 = vld [vmem:[%s19 + $0x20] sm:$0xf]
        %v1493 = vld [vmem:[%s19 + $0x24] sm:$0xf]
        %v1494 = vld [vmem:[%s19 + $0x28] sm:$0xf]
        %v1495 = vld [vmem:[%s19 + $0x2c] sm:$0xf]
        %v1496 = vld [vmem:[%s19 + $0x30] sm:$0xf]
        %v1497 = vld [vmem:[%s19 + $0x34] sm:$0xf]
        %v1498 = vld [vmem:[%s19 + $0x38] sm:$0xf]
        %v1499 = vld [vmem:[%s19 + $0x3c] sm:$0xf]
        %v1500 = vld [vmem:[%s19 + $0x40] sm:$0xf]
        %v1501 = vld [vmem:[%s19 + $0x44] sm:$0xf]
        %v1502 = vld [vmem:[%s19 + $0x48] sm:$0xf]
        %v1503 = vld [vmem:[%s19 + $0x4c] sm:$0xf]
        %v1504 = vld [vmem:[%s19 + $0x50] sm:$0xf]
        %v1505 = vld [vmem:[%s19 + $0x54] sm:$0xf]
        %v1506 = vld [vmem:[%s19 + $0x58] sm:$0xf]
        %v1507 = vld [vmem:[%s19 + $0x5c] sm:$0xf]
        %v1508 = vld [vmem:[%s19 + $0x60] sm:$0xf]
        %v1509 = vld [vmem:[%s19 + $0x64] sm:$0xf]
        %v1510 = vld [vmem:[%s19 + $0x68] sm:$0xf]
        %v1511 = vld [vmem:[%s19 + $0x6c] sm:$0xf]
        %v1512 = vld [vmem:[%s19 + $0x70] sm:$0xf]
        %v1513 = vld [vmem:[%s19 + $0x74] sm:$0xf]
        %v1514 = vld [vmem:[%s19 + $0x78] sm:$0xf]
        %v1515 = vld [vmem:[%s19 + $0x7c] sm:$0xf]
        %v1516 = vpack.c.bf16 %v1480, %v1480
        %v1517 = vpack.c.bf16 %v1483, %v1483
        %v1518 = vld [vmem:[%s20] sm:$0x1]
        %v1551 = vunpack.c.l.b16 %v1484
        %v1552 = vunpack.c.l.b16 %v1485
        %v1553 = vunpack.c.l.b16 %v1486
        %v1554 = vunpack.c.l.b16 %v1487
        %v1555 = vunpack.c.l.b16 %v1488
        %v1556 = vunpack.c.l.b16 %v1489
        %v1557 = vunpack.c.l.b16 %v1490
        %v1558 = vunpack.c.l.b16 %v1491
        %v1559 = vunpack.c.l.b16 %v1492
        %v1560 = vunpack.c.l.b16 %v1493
        %v1561 = vunpack.c.l.b16 %v1494
        %v1562 = vunpack.c.l.b16 %v1495
        %v1563 = vunpack.c.l.b16 %v1496
        %v1564 = vunpack.c.l.b16 %v1497
        %v1565 = vunpack.c.l.b16 %v1498
        %v1566 = vunpack.c.l.b16 %v1499
        %v1567 = vunpack.c.l.b16 %v1500
        %v1568 = vunpack.c.l.b16 %v1501
        %v1569 = vunpack.c.l.b16 %v1502
        %v1570 = vunpack.c.l.b16 %v1503
        %v1571 = vunpack.c.l.b16 %v1504
        %v1572 = vunpack.c.l.b16 %v1505
        %v1573 = vunpack.c.l.b16 %v1506
        %v1574 = vunpack.c.l.b16 %v1507
        %v1575 = vunpack.c.l.b16 %v1508
        %v1576 = vunpack.c.l.b16 %v1509
        %v1577 = vunpack.c.l.b16 %v1510
        %v1578 = vunpack.c.l.b16 %v1511
        %v1579 = vunpack.c.l.b16 %v1512
        %v1580 = vunpack.c.l.b16 %v1513
        %v1581 = vunpack.c.l.b16 %v1514
        %v1582 = vunpack.c.l.b16 %v1515
        %v1583 = vpack.c.b16 %v1552, %v1551
        %v1584 = vpack.c.b16 %v1554, %v1553
        %v1585 = vpack.c.b16 %v1556, %v1555
        %v1586 = vpack.c.b16 %v1558, %v1557
        %v1587 = vpack.c.b16 %v1560, %v1559
        %v1588 = vpack.c.b16 %v1562, %v1561
        %v1589 = vpack.c.b16 %v1564, %v1563
        %v1590 = vpack.c.b16 %v1566, %v1565
        %v1591 = vpack.c.b16 %v1568, %v1567
        %v1592 = vpack.c.b16 %v1570, %v1569
        %v1593 = vpack.c.b16 %v1572, %v1571
        %v1594 = vpack.c.b16 %v1574, %v1573
        %v1595 = vpack.c.b16 %v1576, %v1575
        %v1596 = vpack.c.b16 %v1578, %v1577
        %v1597 = vpack.c.b16 %v1580, %v1579
        %v1598 = vpack.c.b16 %v1582, %v1581
        %1615 = vmatprep.subr.bf16.mxu0 0
        %1616 = vmatpush1.bf16.msra.mxu0 %v1583
        %1617 = vmatprep.subr.bf16.mxu0 0
        %1618 = vmatpush1.bf16.msra.mxu0 %v1584
        %1619 = vmatprep.subr.bf16.mxu0 0
        %1620 = vmatpush1.bf16.msra.mxu0 %v1585
        %1621 = vmatprep.subr.bf16.mxu0 0
        %1622 = vmatpush1.bf16.msra.mxu0 %v1586
        %1623 = vmatprep.subr.bf16.mxu0 0
        %1624 = vmatpush1.bf16.msra.mxu0 %v1587
        %1625 = vmatprep.subr.bf16.mxu0 0
        %1626 = vmatpush1.bf16.msra.mxu0 %v1588
        %1627 = vmatprep.subr.bf16.mxu0 0
        %1628 = vmatpush1.bf16.msra.mxu0 %v1589
        %1629 = vmatprep.subr.bf16.mxu0 0
        %1630 = vmatpush1.bf16.msra.mxu0 %v1590
        %1631 = vmatprep.subr.bf16.mxu0 0
        %1632 = vmatpush1.bf16.msra.mxu0 %v1591
        %1633 = vmatprep.subr.bf16.mxu0 0
        %1634 = vmatpush1.bf16.msra.mxu0 %v1592
        %1635 = vmatprep.subr.bf16.mxu0 0
        %1636 = vmatpush1.bf16.msra.mxu0 %v1593
        %1637 = vmatprep.subr.bf16.mxu0 0
        %1638 = vmatpush1.bf16.msra.mxu0 %v1594
        %1639 = vmatprep.subr.bf16.mxu0 0
        %1640 = vmatpush1.bf16.msra.mxu0 %v1595
        %1641 = vmatprep.subr.bf16.mxu0 0
        %1642 = vmatpush1.bf16.msra.mxu0 %v1596
        %1643 = vmatprep.subr.bf16.mxu0 0
        %1644 = vmatpush1.bf16.msra.mxu0 %v1597
        %1645 = vmatprep.subr.bf16.mxu0 0
        %1646 = vmatpush1.bf16.msra.mxu0 %v1598
        %1647 = vmatprep.mubr.bf16.mxu0 %v1517
        %1648 = vmatmul.mubr.bf16.gmra.mrb[0].mxu0 %v1516
        %v1649 = vpop.f32.mrb[0].mxu0
        %v1650 = vadd.f32 %v1518, %v1649
        %v1651 = vpop.f32.mrb[0].mxu0
        %v1652 = vpop.f32.mrb[0].mxu0
        %v1653 = vpop.f32.mrb[0].mxu0
        %1654 = vdwg.mxu0
        %1655 = vst [vmem:[%s677] sm:$0x1] %v1650
        %s1656 = sand.u32 %s495, 1
        %s1657 = scalar_lea.sflag [#allocation3], %s1656
        %s1658 = sand.u32 %s495, 1
        %s1659 = scalar_lea.vmem [#allocation5], %s1658
        // Predicated region
        $region109: #{searchable_image_text_net_forward.1} parent=103 // pred_check
          %p1660 = pneg %p505
        $region110: #{searchable_image_text_net_forward.1} parent=103 // pred_check_branch
          %1662 = sbr.rel (%p1660) target = $region112
        $region111: #{searchable_image_text_net_forward.1} parent=103 // pred_region
          %s1664 = ssub.s32 16, 16
          %1665 = vsyncadd %s1657, %s1664
          %s1666 = smul.addr %s36, 16
          %s1667 = scalar_lea.hbm %s21, %s1666
          %s1669 = sshll.u32 %s1659, 4
          %s1670 = int_to_ptr.vmem [resolvable:$true] %s1669
          %1672 = dma.vmem_to_hbm [thread:$0]  %s1670, 16, %s1667, %s1657
        $region112: #{searchable_image_text_net_forward.1} parent=103 // pred_fallthru
          _
      $region104: #{searchable_image_text_net_forward.1} parent=5 // pred_fallthru
        _
      %p1673 = scmp.le.s32.totalorder 2, %s31
      // Predicated region
      $region113: #{searchable_image_text_net_forward.1} parent=5 // pred_check
        %p1674 = pneg %p1673
      $region114: #{searchable_image_text_net_forward.1} parent=5 // pred_check_branch
        %1676 = sbr.rel (%p1674) target = $region116
      $region115: #{searchable_image_text_net_forward.1} parent=5 // pred_region
        %s1677 = ssub.s32 %s31, 2
        // Predicated region
        $region117: #{searchable_image_text_net_forward.1} parent=115 // pred_check
          %p1678 = pneg %p511
        $region118: #{searchable_image_text_net_forward.1} parent=115 // pred_check_branch
          %1680 = sbr.rel (%p1678) target = $region120
        $region119: #{searchable_image_text_net_forward.1} parent=115 // pred_region
          %s1681 = sand.u32 %s496, 1
          %s1682 = scalar_lea.sflag [#allocation3], %s1681
          %s1683 = sand.u32 %s496, 1
          %s1684 = scalar_lea.vmem [#allocation5], %s1683
          %1685 = dma.done %s1682, 16
        $region120: #{searchable_image_text_net_forward.1} parent=115 // pred_fallthru
          _
      $region116: #{searchable_image_text_net_forward.1} parent=5 // pred_fallthru
        _
    $region6: #{searchable_image_text_net_forward.1} parent=1 // loop_footer
      %s35 = sadd.s32 1, %s31
    $region7: #{searchable_image_text_net_forward.1} parent=1 // loop_footer_branch
      %30 = sbr.rel target = $region3
    $region8: #{searchable_image_text_net_forward.1} parent=1 // loop_exit
      _
    %1686 = vsyncpa [#allocation3], 1
    %s1687 = scalar_lea.sflag [#allocation3], 1
    %1688 = vsyncpa %s1687, 1
    %1689 = vsyncpa [#allocation4], 1
    %s1690 = scalar_lea.sflag [#allocation4], 1
    %1691 = vsyncpa %s1690, 1

</llo_original>
